<compile_context>
chip_gen: v5e
topology: v5e:2x2
jax: 0.10.0
libtpu: 0.0.40
codegen_flags: <defaults>
</compile_context>

<pallas_src>
import functools

import jax
import jax.numpy as jnp
import numpy as np
from jax import lax
from jax.experimental import pallas as pl
from jax.experimental.pallas import tpu as pltpu


def _round_up(x, m):
    return (x + m - 1) // m * m


# ----------------------------- Pallas kernel -----------------------------

def _convup_kernel(x_ref, wf_ref, mask_ref, up_ref, o_ref, conv_ref, *,
                   B, c_in_p, c_out_p, W, HW):
    # x_ref:    (B, c_in_p, HW)      batch block; channels on sublanes, flat spatial on lanes
    # wf_ref:   (c_out_p, 9*c_in_p)  fused conv taps, col = (kh*3+kw)*c_in_p + ci  (MXU dtype)
    # mask_ref: (9, 1, HW)           f32, 1.0 where the shifted source pixel is in-bounds
    # up_ref:   (HW, OHW)            f32 bilinear (align_corners=True) operator
    # o_ref:    (B, c_out_p, OHW)    f32 output block
    # conv_ref: (B*c_out_p, HW)      f32 VMEM scratch holding the conv results
    wf = wf_ref[...]                 # hoisted out of the image loop
    masks = mask_ref[...]            # (9, 1, HW)

    def conv_one_image(b, carry):
        # Tap shuffling / border masking runs in f32 on the VPU/XLU (safe on
        # v5e's f32-only VPU); only the MXU operands are narrowed.
        x = x_ref[b].astype(jnp.float32)              # (c_in_p, HW)
        taps = []
        for kh in range(3):
            for kw in range(3):
                t = kh * 3 + kw
                off = (kh - 1) * W + (kw - 1)         # flat source offset
                if off == 0:
                    taps.append(x)                    # center tap: no shift, no mask
                else:
                    # shifted[p] = x[(p + off) mod HW]; wrapped lanes zeroed by mask
                    shifted = pltpu.roll(x, (-off) % HW, axis=1)
                    taps.append(shifted * masks[t])
        taps = jnp.concatenate(taps, axis=0).astype(wf.dtype)   # (9*c_in_p, HW)
        # one fused conv matmul per image: K = 9*c_in_p (e.g. 72)
        conv_b = jnp.dot(wf, taps, preferred_element_type=jnp.float32)
        row = pl.multiple_of(b * c_out_p, 8)
        conv_ref[pl.ds(row, c_out_p), :] = conv_b
        return carry

    lax.fori_loop(0, B, conv_one_image, 0, unroll=(B <= 8))

    # bilinear upsample for the whole batch block: ONE MXU matmul with
    # M = B*c_out_p rows and unmasked lane-dense stores.
    up_out = jnp.dot(conv_ref[...], up_ref[...],
                     preferred_element_type=jnp.float32)        # (B*c_out_p, OHW)
    o_ref[...] = up_out.reshape(o_ref.shape).astype(o_ref.dtype)


# ------------------------- one-time parameter prep -------------------------

def _interp_matrix_1d(in_size, out_size):
    """Row-stochastic (out_size, in_size) bilinear matrix, align_corners=True."""
    u = np.zeros((out_size, in_size), np.float64)
    if out_size == 1 or in_size == 1:
        u[:, 0] = 1.0
        return u
    src = np.arange(out_size, dtype=np.float64) * (in_size - 1) / (out_size - 1)
    lo = np.clip(np.floor(src).astype(np.int64), 0, in_size - 1)
    hi = np.clip(lo + 1, 0, in_size - 1)
    frac = src - lo
    u[np.arange(out_size), lo] += 1.0 - frac
    u[np.arange(out_size), hi] += frac
    return u


def prepare_convup_params(w_oihw, H, W, size=None, *, mxu_dtype=jnp.float32):
    """Hoisted per-parameter work: fused tap weights, border masks, interp matrix."""
    w = np.asarray(w_oihw, np.float32)
    c_out, c_in, kh, kw = w.shape
    assert (kh, kw) == (3, 3)
    out_h, out_w = (2 * H, 2 * W) if size is None else size

    c_in_p = _round_up(c_in, 8)            # sublane-dense channels / conv-K
    c_out_p = _round_up(c_out, 8)

    # fused conv weight: wf[co, (kh*3+kw)*c_in_p + ci] = w[co, ci, kh, kw]
    w_p = np.zeros((c_out_p, c_in_p, 3, 3), np.float32)
    w_p[:c_out, :c_in] = w
    wf = np.transpose(w_p, (0, 2, 3, 1)).reshape(c_out_p, 9 * c_in_p)

    # border-validity masks for the 8 shifted taps (zero padding for free)
    row = np.repeat(np.arange(H), W)
    col = np.tile(np.arange(W), H)
    masks = np.zeros((9, 1, H * W), np.float32)
    for kh_ in range(3):
        for kw_ in range(3):
            dh, dw = kh_ - 1, kw_ - 1
            valid = ((row + dh >= 0) & (row + dh <= H - 1) &
                     (col + dw >= 0) & (col + dw <= W - 1))
            masks[kh_ * 3 + kw_, 0, :] = valid.astype(np.float32)

    # separable bilinear upsample as one (H*W, OH*OW) operator
    uy = _interp_matrix_1d(H, out_h)
    ux = _interp_matrix_1d(W, out_w)
    up = np.kron(uy, ux).T.astype(np.float32)    # up[y*W+x, oy*OW+ox] = Uy*Ux

    return (jnp.asarray(wf, mxu_dtype), jnp.asarray(masks, jnp.float32),
            jnp.asarray(up, jnp.float32), (out_h, out_w), c_out)


# ------------------------------ forward pass ------------------------------

def _pick_batch_block(n, c_out_p, target_rows=256, min_steps=2):
    """Images per grid step: fill the MXU M dim (128 on v5e, 256 on v6e/v7x)
    while keeping >= 2 grid steps so both v7x TensorCores get work."""
    b = max(1, target_rows // c_out_p)
    if n >= min_steps:
        b = min(b, pl.cdiv(n, min_steps))
    return max(1, min(b, n))


def conv_up_forward(x_nchw, wf, masks, up, out_hw, *, c_out,
                    mxu_dtype=jnp.float32, batch_block=None):
    """x_nchw: (N, C_in, H, W) -> (N, C_out, OH, OW) f32."""
    N, c_in, H, W = x_nchw.shape
    c_out_p, k9 = wf.shape
    c_in_p = k9 // 9
    HW = H * W
    out_h, out_w = out_hw
    OHW = out_h * out_w

    B = batch_block if batch_block is not None else _pick_batch_block(N, c_out_p)
    n_blocks = pl.cdiv(N, B)
    N_pad = n_blocks * B

    x = x_nchw.astype(mxu_dtype).reshape(N, c_in, HW)     # free reshape
    if c_in_p != c_in or N_pad != N:
        x = jnp.pad(x, ((0, N_pad - N), (0, c_in_p - c_in), (0, 0)))

    # explicit VMEM budget (v5e's default scoped limit is only 16 MiB)
    elt = jnp.dtype(mxu_dtype).itemsize
    vmem_est = (2 * B * c_in_p * HW * elt          # x block, double buffered
                + 2 * B * c_out_p * OHW * 4        # out block, double buffered
                + 2 * HW * OHW * 4                 # interp matrix (worst case)
                + 2 * 9 * HW * 4                   # masks
                + 2 * c_out_p * 9 * c_in_p * elt   # fused weight
                + B * c_out_p * HW * 4)            # conv scratch
    vmem_limit = int(min(max(vmem_est + (4 << 20), 16 << 20), 56 << 20))

    kernel = functools.partial(_convup_kernel, B=B, c_in_p=c_in_p,
                               c_out_p=c_out_p, W=W, HW=HW)

    def build(single_buffer_consts):
        const_kw = ({'pipeline_mode': pl.Buffered(1)}
                    if single_buffer_consts else {})
        grid_spec = pltpu.PrefetchScalarGridSpec(
            num_scalar_prefetch=0,
            grid=(n_blocks,),
            in_specs=[
                pl.BlockSpec((B, c_in_p, HW), lambda n: (n, 0, 0)),             # x
                pl.BlockSpec((c_out_p, 9 * c_in_p), lambda n: (0, 0), **const_kw),  # fused weight
                pl.BlockSpec((9, 1, HW), lambda n: (0, 0, 0), **const_kw),      # border masks
                pl.BlockSpec((HW, OHW), lambda n: (0, 0), **const_kw),          # interp matrix
            ],
            out_specs=pl.BlockSpec((B, c_out_p, OHW), lambda n: (n, 0, 0)),
            scratch_shapes=[pltpu.VMEM((B * c_out_p, HW), jnp.float32)],
        )
        return pl.pallas_call(
            kernel,
            out_shape=jax.ShapeDtypeStruct((N_pad, c_out_p, OHW), jnp.float32),
            grid_spec=grid_spec,
            compiler_params=pltpu.CompilerParams(
                dimension_semantics=("parallel",),      # batch blocks across TCs on v7x
                vmem_limit_bytes=vmem_limit),
        )

    out_flat = None
    # Prefer single-buffered constant operands (halves their VMEM footprint);
    # fall back to default double buffering if this build rejects Buffered(1).
    for single in (True, False):
        try:
            out_flat = jax.block_until_ready(build(single)(x, wf, masks, up))
            break
        except Exception:
            if not single:
                raise

    out = out_flat.reshape(N_pad, c_out_p, out_h, out_w)
    return out[:N, :c_out]


# --------------------------- setup / verification ---------------------------

def spectral_normalize(w_oihw, key, n_iter=10):
    """Emulates nn.utils.spectral_norm: divide weight by its top singular value."""
    wm = w_oihw.reshape(w_oihw.shape[0], -1)
    u = jax.random.normal(key, (wm.shape[0],), dtype=jnp.float32)
    u = u / (jnp.linalg.norm(u) + 1e-12)
    v = None
    for _ in range(n_iter):
        v = wm.T @ u
        v = v / (jnp.linalg.norm(v) + 1e-12)
        u = wm @ v
        u = u / (jnp.linalg.norm(u) + 1e-12)
    sigma = u @ (wm @ v)
    return w_oihw / sigma


def _bilinear_align_corners_ref(x, out_h, out_w):
    """Independent pure-JAX bilinear upsample, align_corners=True (NCHW)."""
    N, C, H, W = x.shape
    ys = jnp.linspace(0.0, H - 1.0, out_h) if out_h > 1 else jnp.zeros((1,), jnp.float32)
    xs = jnp.linspace(0.0, W - 1.0, out_w) if out_w > 1 else jnp.zeros((1,), jnp.float32)
    y0 = jnp.clip(jnp.floor(ys).astype(jnp.int32), 0, H - 1)
    x0 = jnp.clip(jnp.floor(xs).astype(jnp.int32), 0, W - 1)
    y1 = jnp.clip(y0 + 1, 0, H - 1)
    x1 = jnp.clip(x0 + 1, 0, W - 1)
    wy = (ys - y0.astype(jnp.float32)).reshape(1, 1, out_h, 1)
    wx = (xs - x0.astype(jnp.float32)).reshape(1, 1, 1, out_w)
    g0, g1 = x[:, :, y0, :], x[:, :, y1, :]
    tl, tr = g0[:, :, :, x0], g0[:, :, :, x1]
    bl, br = g1[:, :, :, x0], g1[:, :, :, x1]
    top = tl * (1.0 - wx) + tr * wx
    bot = bl * (1.0 - wx) + br * wx
    return top * (1.0 - wy) + bot * wy


def ref_conv_up(x_nchw, w_oihw, out_h, out_w):
    conv = jax.lax.conv_general_dilated(
        x_nchw, w_oihw, window_strides=(1, 1), padding=((1, 1), (1, 1)),
        dimension_numbers=("NCHW", "OIHW", "NCHW"),
        precision=jax.lax.Precision.HIGHEST)
    return _bilinear_align_corners_ref(conv, out_h, out_w)


if __name__ == "__main__":
    N, C_IN, C_OUT, H, W = 2, 4, 8, 16, 16

    key = jax.random.PRNGKey(0)
    k_x, k_w, k_u, k_x2 = jax.random.split(key, 4)

    x = jax.random.normal(k_x, (N, C_IN, H, W), dtype=jnp.float32)
    w_raw = 0.1 * jax.random.normal(k_w, (C_OUT, C_IN, 3, 3), dtype=jnp.float32)
    w_sn = spectral_normalize(w_raw, k_u)          # spectral_norm'd conv weight

    # ---- module-exact f32 path (small demo batch) ----
    wf, masks, up, out_hw, c_out = prepare_convup_params(
        w_sn, H, W, size=None, mxu_dtype=jnp.float32)
    out = jax.block_until_ready(
        conv_up_forward(x, wf, masks, up, out_hw, c_out=c_out,
                        mxu_dtype=jnp.float32))
    ref = ref_conv_up(x, w_sn, out_hw[0], out_hw[1])
    np.testing.assert_allclose(np.asarray(out), np.asarray(ref),
                               rtol=1e-4, atol=1e-4)

    # ---- batched grid blocks (B > 1) with batch padding, still f32 ----
    N2 = 5
    x2 = jax.random.normal(k_x2, (N2, C_IN, H, W), dtype=jnp.float32)
    out2 = jax.block_until_ready(
        conv_up_forward(x2, wf, masks, up, out_hw, c_out=c_out,
                        mxu_dtype=jnp.float32, batch_block=3))
    ref2 = ref_conv_up(x2, w_sn, out_hw[0], out_hw[1])
    np.testing.assert_allclose(np.asarray(out2), np.asarray(ref2),
                               rtol=1e-4, atol=1e-4)

    # ---- bf16 MXU-operand path (f32 accumulation / interp / output) ----
    wf_b, masks_b, up_b, out_hw_b, _ = prepare_convup_params(
        w_sn, H, W, size=None, mxu_dtype=jnp.bfloat16)
    out3 = jax.block_until_ready(
        conv_up_forward(x2, wf_b, masks_b, up_b, out_hw_b, c_out=c_out,
                        mxu_dtype=jnp.bfloat16, batch_block=3))
    x2_b = x2.astype(jnp.bfloat16).astype(jnp.float32)
    w_b = w_sn.astype(jnp.bfloat16).astype(jnp.float32)
    ref3 = ref_conv_up(x2_b, w_b, out_hw_b[0], out_hw_b[1])
    np.testing.assert_allclose(np.asarray(out3), np.asarray(ref3),
                               rtol=2e-3, atol=2e-3)

    print("KERNEL_OK")
</pallas_src>

<mosaic_0001>
module attributes {stable_mosaic.version = 11 : i64} {
  func.func @_convup_kernel(%arg0: i32, %arg1: memref<1x8x256xf32, #tpu.memory_space<vmem>>, %arg2: memref<8x72xf32, #tpu.memory_space<vmem>>, %arg3: memref<9x1x256xf32, #tpu.memory_space<vmem>>, %arg4: memref<256x1024xf32, #tpu.memory_space<vmem>>, %arg5: memref<1x8x1024xf32, #tpu.memory_space<vmem>>, %arg6: memref<8x256xf32, #tpu.memory_space<vmem>>) attributes {dimension_semantics = [#tpu.dimension_semantics<parallel>], iteration_bounds = array<i64: 2>, scalar_prefetch = 0 : i64, scratch_operands = 1 : i64, tpu.core_type = #tpu.core_type<tc>, window_params = [{transform_indices = @transform_0, window_bounds = array<i64: 1, 8, 256>}, {pipeline_mode = #tpu.pipeline_mode<synchronous>, transform_indices = @transform_1, window_bounds = array<i64: 8, 72>}, {pipeline_mode = #tpu.pipeline_mode<synchronous>, transform_indices = @transform_2, window_bounds = array<i64: 9, 1, 256>}, {pipeline_mode = #tpu.pipeline_mode<synchronous>, transform_indices = @transform_3, window_bounds = array<i64: 256, 1024>}, {transform_indices = @transform_4, window_bounds = array<i64: 1, 8, 1024>}]} {
    %c0 = arith.constant 0 : index
    %c0_0 = arith.constant 0 : index
    %0 = vector.load %arg2[%c0, %c0_0] : memref<8x72xf32, #tpu.memory_space<vmem>>, vector<8x72xf32>
    %c0_1 = arith.constant 0 : index
    %c0_2 = arith.constant 0 : index
    %c0_3 = arith.constant 0 : index
    %1 = vector.load %arg3[%c0_1, %c0_2, %c0_3] : memref<9x1x256xf32, #tpu.memory_space<vmem>>, vector<9x1x256xf32>
    %c0_i32 = arith.constant 0 : i32
    %2 = arith.index_cast %c0_i32 : i32 to index
    %c0_4 = arith.constant 0 : index
    %c0_5 = arith.constant 0 : index
    %3 = vector.load %arg1[%2, %c0_4, %c0_5] : memref<1x8x256xf32, #tpu.memory_space<vmem>>, vector<1x8x256xf32>
    %4 = vector.shape_cast %3 : vector<1x8x256xf32> to vector<8x256xf32>
    %c17_i32 = arith.constant 17 : i32
    %5 = tpu.dynamic_rotate %4 by %c17_i32 dim 1 : vector<8x256xf32>, i32 -> vector<8x256xf32>
    %6 = vector.extract_strided_slice %1 {offsets = [0, 0, 0], sizes = [1, 1, 256], strides = [1, 1, 1]} : vector<9x1x256xf32> to vector<1x1x256xf32>
    %7 = vector.shape_cast %6 : vector<1x1x256xf32> to vector<1x256xf32>
    %8 = vector.broadcast %7 : vector<1x256xf32> to vector<8x256xf32>
    %9 = arith.mulf %5, %8 : vector<8x256xf32>
    %c16_i32 = arith.constant 16 : i32
    %10 = tpu.dynamic_rotate %4 by %c16_i32 dim 1 : vector<8x256xf32>, i32 -> vector<8x256xf32>
    %11 = vector.extract_strided_slice %1 {offsets = [1, 0, 0], sizes = [1, 1, 256], strides = [1, 1, 1]} : vector<9x1x256xf32> to vector<1x1x256xf32>
    %12 = vector.shape_cast %11 : vector<1x1x256xf32> to vector<1x256xf32>
    %13 = vector.broadcast %12 : vector<1x256xf32> to vector<8x256xf32>
    %14 = arith.mulf %10, %13 : vector<8x256xf32>
    %c15_i32 = arith.constant 15 : i32
    %15 = tpu.dynamic_rotate %4 by %c15_i32 dim 1 : vector<8x256xf32>, i32 -> vector<8x256xf32>
    %16 = vector.extract_strided_slice %1 {offsets = [2, 0, 0], sizes = [1, 1, 256], strides = [1, 1, 1]} : vector<9x1x256xf32> to vector<1x1x256xf32>
    %17 = vector.shape_cast %16 : vector<1x1x256xf32> to vector<1x256xf32>
    %18 = vector.broadcast %17 : vector<1x256xf32> to vector<8x256xf32>
    %19 = arith.mulf %15, %18 : vector<8x256xf32>
    %c1_i32 = arith.constant 1 : i32
    %20 = tpu.dynamic_rotate %4 by %c1_i32 dim 1 : vector<8x256xf32>, i32 -> vector<8x256xf32>
    %21 = vector.extract_strided_slice %1 {offsets = [3, 0, 0], sizes = [1, 1, 256], strides = [1, 1, 1]} : vector<9x1x256xf32> to vector<1x1x256xf32>
    %22 = vector.shape_cast %21 : vector<1x1x256xf32> to vector<1x256xf32>
    %23 = vector.broadcast %22 : vector<1x256xf32> to vector<8x256xf32>
    %24 = arith.mulf %20, %23 : vector<8x256xf32>
    %c255_i32 = arith.constant 255 : i32
    %25 = tpu.dynamic_rotate %4 by %c255_i32 dim 1 : vector<8x256xf32>, i32 -> vector<8x256xf32>
    %26 = vector.extract_strided_slice %1 {offsets = [5, 0, 0], sizes = [1, 1, 256], strides = [1, 1, 1]} : vector<9x1x256xf32> to vector<1x1x256xf32>
    %27 = vector.shape_cast %26 : vector<1x1x256xf32> to vector<1x256xf32>
    %28 = vector.broadcast %27 : vector<1x256xf32> to vector<8x256xf32>
    %29 = arith.mulf %25, %28 : vector<8x256xf32>
    %c241_i32 = arith.constant 241 : i32
    %30 = tpu.dynamic_rotate %4 by %c241_i32 dim 1 : vector<8x256xf32>, i32 -> vector<8x256xf32>
    %31 = vector.extract_strided_slice %1 {offsets = [6, 0, 0], sizes = [1, 1, 256], strides = [1, 1, 1]} : vector<9x1x256xf32> to vector<1x1x256xf32>
    %32 = vector.shape_cast %31 : vector<1x1x256xf32> to vector<1x256xf32>
    %33 = vector.broadcast %32 : vector<1x256xf32> to vector<8x256xf32>
    %34 = arith.mulf %30, %33 : vector<8x256xf32>
    %c240_i32 = arith.constant 240 : i32
    %35 = tpu.dynamic_rotate %4 by %c240_i32 dim 1 : vector<8x256xf32>, i32 -> vector<8x256xf32>
    %36 = vector.extract_strided_slice %1 {offsets = [7, 0, 0], sizes = [1, 1, 256], strides = [1, 1, 1]} : vector<9x1x256xf32> to vector<1x1x256xf32>
    %37 = vector.shape_cast %36 : vector<1x1x256xf32> to vector<1x256xf32>
    %38 = vector.broadcast %37 : vector<1x256xf32> to vector<8x256xf32>
    %39 = arith.mulf %35, %38 : vector<8x256xf32>
    %c239_i32 = arith.constant 239 : i32
    %40 = tpu.dynamic_rotate %4 by %c239_i32 dim 1 : vector<8x256xf32>, i32 -> vector<8x256xf32>
    %41 = vector.extract_strided_slice %1 {offsets = [8, 0, 0], sizes = [1, 1, 256], strides = [1, 1, 1]} : vector<9x1x256xf32> to vector<1x1x256xf32>
    %42 = vector.shape_cast %41 : vector<1x1x256xf32> to vector<1x256xf32>
    %43 = vector.broadcast %42 : vector<1x256xf32> to vector<8x256xf32>
    %44 = arith.mulf %40, %43 : vector<8x256xf32>
    %45 = tpu.concatenate %9, %14, %19, %24, %4, %29, %34, %39, %44 in 0 : vector<8x256xf32>, vector<8x256xf32>, vector<8x256xf32>, vector<8x256xf32>, vector<8x256xf32>, vector<8x256xf32>, vector<8x256xf32>, vector<8x256xf32>, vector<8x256xf32> -> vector<72x256xf32>
    %cst = arith.constant dense<0.000000e+00> : vector<8x256xf32>
    %46 = tpu.matmul %0, %45, %cst {dimension_numbers = #tpu.dot_dimension_numbers<[1], [0], [0], [1], [0, 0, 1, 1], [], []>} : vector<8x72xf32>, vector<72x256xf32>, vector<8x256xf32> -> vector<8x256xf32>
    %c8_i32 = arith.constant 8 : i32
    %47 = arith.muli %c0_i32, %c8_i32 : i32
    %48 = tpu.assume_multiple %47, 8 : i32
    %49 = arith.index_cast %48 : i32 to index
    %c0_6 = arith.constant 0 : index
    %50 = vector.load %arg6[%49, %c0_6] : memref<8x256xf32, #tpu.memory_space<vmem>>, vector<8x256xf32>
    tpu.vector_store %arg6[%49, %c0_6], %46 {strides = array<i32>} : memref<8x256xf32, #tpu.memory_space<vmem>>, vector<8x256xf32>,
    %c1_i32_7 = arith.constant 1 : i32
    %c0_8 = arith.constant 0 : index
    %c0_9 = arith.constant 0 : index
    %51 = vector.load %arg6[%c0_8, %c0_9] : memref<8x256xf32, #tpu.memory_space<vmem>>, vector<8x256xf32>
    %c0_10 = arith.constant 0 : index
    %c0_11 = arith.constant 0 : index
    %52 = vector.load %arg4[%c0_10, %c0_11] : memref<256x1024xf32, #tpu.memory_space<vmem>>, vector<256x1024xf32>
    %cst_12 = arith.constant dense<0.000000e+00> : vector<8x1024xf32>
    %53 = tpu.matmul %51, %52, %cst_12 {dimension_numbers = #tpu.dot_dimension_numbers<[1], [0], [0], [1], [0, 0, 1, 1], [], []>} : vector<8x256xf32>, vector<256x1024xf32>, vector<8x1024xf32> -> vector<8x1024xf32>
    %54 = vector.shape_cast %53 : vector<8x1024xf32> to vector<1x8x1024xf32>
    %c0_13 = arith.constant 0 : index
    %c0_14 = arith.constant 0 : index
    %c0_15 = arith.constant 0 : index
    %55 = vector.load %arg5[%c0_13, %c0_14, %c0_15] : memref<1x8x1024xf32, #tpu.memory_space<vmem>>, vector<1x8x1024xf32>
    tpu.vector_store %arg5[%c0_13, %c0_14, %c0_15], %54 {strides = array<i32>} : memref<1x8x1024xf32, #tpu.memory_space<vmem>>, vector<1x8x1024xf32>,
    return
  }
  func.func @transform_0(%arg0: i32) -> (i32, i32, i32) {
    %c0_i32 = arith.constant 0 : i32
    %c0_i32_0 = arith.constant 0 : i32
    %c0_i32_1 = arith.constant 0 : i32
    return %arg0, %c0_i32, %c0_i32_0 : i32, i32, i32
  }
  func.func @transform_1(%arg0: i32) -> (i32, i32) {
    %c0_i32 = arith.constant 0 : i32
    %c0_i32_0 = arith.constant 0 : i32
    %c0_i32_1 = arith.constant 0 : i32
    return %c0_i32, %c0_i32_0 : i32, i32
  }
  func.func @transform_2(%arg0: i32) -> (i32, i32, i32) {
    %c0_i32 = arith.constant 0 : i32
    %c0_i32_0 = arith.constant 0 : i32
    %c0_i32_1 = arith.constant 0 : i32
    %c0_i32_2 = arith.constant 0 : i32
    return %c0_i32, %c0_i32_0, %c0_i32_1 : i32, i32, i32
  }
  func.func @transform_3(%arg0: i32) -> (i32, i32) {
    %c0_i32 = arith.constant 0 : i32
    %c0_i32_0 = arith.constant 0 : i32
    %c0_i32_1 = arith.constant 0 : i32
    return %c0_i32, %c0_i32_0 : i32, i32
  }
  func.func @transform_4(%arg0: i32) -> (i32, i32, i32) {
    %c0_i32 = arith.constant 0 : i32
    %c0_i32_0 = arith.constant 0 : i32
    %c0_i32_1 = arith.constant 0 : i32
    return %arg0, %c0_i32, %c0_i32_0 : i32, i32, i32
  }
}

module attributes {stable_mosaic.version = 11 : i64} {
  func.func @_convup_kernel(%arg0: i32, %arg1: memref<1x8x256xf32, #tpu.memory_space<vmem>>, %arg2: memref<8x72xf32, #tpu.memory_space<vmem>>, %arg3: memref<9x1x256xf32, #tpu.memory_space<vmem>>, %arg4: memref<256x1024xf32, #tpu.memory_space<vmem>>, %arg5: memref<1x8x1024xf32, #tpu.memory_space<vmem>>, %arg6: memref<8x256xf32, #tpu.memory_space<vmem>>) attributes {dimension_semantics = [#tpu.dimension_semantics<parallel>], iteration_bounds = array<i64: 2>, scalar_prefetch = 0 : i64, scratch_operands = 1 : i64, tpu.core_type = #tpu.core_type<tc>, window_params = [{transform_indices = @transform_0, window_bounds = array<i64: 1, 8, 256>}, {pipeline_mode = #tpu.pipeline_mode<synchronous>, transform_indices = @transform_1, window_bounds = array<i64: 8, 72>}, {pipeline_mode = #tpu.pipeline_mode<synchronous>, transform_indices = @transform_2, window_bounds = array<i64: 9, 1, 256>}, {pipeline_mode = #tpu.pipeline_mode<synchronous>, transform_indices = @transform_3, window_bounds = array<i64: 256, 1024>}, {transform_indices = @transform_4, window_bounds = array<i64: 1, 8, 1024>}]} {
    %c0 = arith.constant 0 : index
    %c0_0 = arith.constant 0 : index
    %0 = vector.load %arg2[%c0, %c0_0] : memref<8x72xf32, #tpu.memory_space<vmem>>, vector<8x72xf32>
    %c0_1 = arith.constant 0 : index
    %c0_2 = arith.constant 0 : index
    %c0_3 = arith.constant 0 : index
    %1 = vector.load %arg3[%c0_1, %c0_2, %c0_3] : memref<9x1x256xf32, #tpu.memory_space<vmem>>, vector<9x1x256xf32>
    %c0_i32 = arith.constant 0 : i32
    %2 = arith.index_cast %c0_i32 : i32 to index
    %c0_4 = arith.constant 0 : index
    %c0_5 = arith.constant 0 : index
    %3 = vector.load %arg1[%2, %c0_4, %c0_5] : memref<1x8x256xf32, #tpu.memory_space<vmem>>, vector<1x8x256xf32>
    %4 = vector.shape_cast %3 : vector<1x8x256xf32> to vector<8x256xf32>
    %c17_i32 = arith.constant 17 : i32
    %5 = tpu.dynamic_rotate %4 by %c17_i32 dim 1 : vector<8x256xf32>, i32 -> vector<8x256xf32>
    %6 = vector.extract_strided_slice %1 {offsets = [0, 0, 0], sizes = [1, 1, 256], strides = [1, 1, 1]} : vector<9x1x256xf32> to vector<1x1x256xf32>
    %7 = vector.shape_cast %6 : vector<1x1x256xf32> to vector<1x256xf32>
    %8 = vector.broadcast %7 : vector<1x256xf32> to vector<8x256xf32>
    %9 = arith.mulf %5, %8 : vector<8x256xf32>
    %c16_i32 = arith.constant 16 : i32
    %10 = tpu.dynamic_rotate %4 by %c16_i32 dim 1 : vector<8x256xf32>, i32 -> vector<8x256xf32>
    %11 = vector.extract_strided_slice %1 {offsets = [1, 0, 0], sizes = [1, 1, 256], strides = [1, 1, 1]} : vector<9x1x256xf32> to vector<1x1x256xf32>
    %12 = vector.shape_cast %11 : vector<1x1x256xf32> to vector<1x256xf32>
    %13 = vector.broadcast %12 : vector<1x256xf32> to vector<8x256xf32>
    %14 = arith.mulf %10, %13 : vector<8x256xf32>
    %c15_i32 = arith.constant 15 : i32
    %15 = tpu.dynamic_rotate %4 by %c15_i32 dim 1 : vector<8x256xf32>, i32 -> vector<8x256xf32>
    %16 = vector.extract_strided_slice %1 {offsets = [2, 0, 0], sizes = [1, 1, 256], strides = [1, 1, 1]} : vector<9x1x256xf32> to vector<1x1x256xf32>
    %17 = vector.shape_cast %16 : vector<1x1x256xf32> to vector<1x256xf32>
    %18 = vector.broadcast %17 : vector<1x256xf32> to vector<8x256xf32>
    %19 = arith.mulf %15, %18 : vector<8x256xf32>
    %c1_i32 = arith.constant 1 : i32
    %20 = tpu.dynamic_rotate %4 by %c1_i32 dim 1 : vector<8x256xf32>, i32 -> vector<8x256xf32>
    %21 = vector.extract_strided_slice %1 {offsets = [3, 0, 0], sizes = [1, 1, 256], strides = [1, 1, 1]} : vector<9x1x256xf32> to vector<1x1x256xf32>
    %22 = vector.shape_cast %21 : vector<1x1x256xf32> to vector<1x256xf32>
    %23 = vector.broadcast %22 : vector<1x256xf32> to vector<8x256xf32>
    %24 = arith.mulf %20, %23 : vector<8x256xf32>
    %c255_i32 = arith.constant 255 : i32
    %25 = tpu.dynamic_rotate %4 by %c255_i32 dim 1 : vector<8x256xf32>, i32 -> vector<8x256xf32>
    %26 = vector.extract_strided_slice %1 {offsets = [5, 0, 0], sizes = [1, 1, 256], strides = [1, 1, 1]} : vector<9x1x256xf32> to vector<1x1x256xf32>
    %27 = vector.shape_cast %26 : vector<1x1x256xf32> to vector<1x256xf32>
    %28 = vector.broadcast %27 : vector<1x256xf32> to vector<8x256xf32>
    %29 = arith.mulf %25, %28 : vector<8x256xf32>
    %c241_i32 = arith.constant 241 : i32
    %30 = tpu.dynamic_rotate %4 by %c241_i32 dim 1 : vector<8x256xf32>, i32 -> vector<8x256xf32>
    %31 = vector.extract_strided_slice %1 {offsets = [6, 0, 0], sizes = [1, 1, 256], strides = [1, 1, 1]} : vector<9x1x256xf32> to vector<1x1x256xf32>
    %32 = vector.shape_cast %31 : vector<1x1x256xf32> to vector<1x256xf32>
    %33 = vector.broadcast %32 : vector<1x256xf32> to vector<8x256xf32>
    %34 = arith.mulf %30, %33 : vector<8x256xf32>
    %c240_i32 = arith.constant 240 : i32
    %35 = tpu.dynamic_rotate %4 by %c240_i32 dim 1 : vector<8x256xf32>, i32 -> vector<8x256xf32>
    %36 = vector.extract_strided_slice %1 {offsets = [7, 0, 0], sizes = [1, 1, 256], strides = [1, 1, 1]} : vector<9x1x256xf32> to vector<1x1x256xf32>
    %37 = vector.shape_cast %36 : vector<1x1x256xf32> to vector<1x256xf32>
    %38 = vector.broadcast %37 : vector<1x256xf32> to vector<8x256xf32>
    %39 = arith.mulf %35, %38 : vector<8x256xf32>
    %c239_i32 = arith.constant 239 : i32
    %40 = tpu.dynamic_rotate %4 by %c239_i32 dim 1 : vector<8x256xf32>, i32 -> vector<8x256xf32>
    %41 = vector.extract_strided_slice %1 {offsets = [8, 0, 0], sizes = [1, 1, 256], strides = [1, 1, 1]} : vector<9x1x256xf32> to vector<1x1x256xf32>
    %42 = vector.shape_cast %41 : vector<1x1x256xf32> to vector<1x256xf32>
    %43 = vector.broadcast %42 : vector<1x256xf32> to vector<8x256xf32>
    %44 = arith.mulf %40, %43 : vector<8x256xf32>
    %45 = tpu.concatenate %9, %14, %19, %24, %4, %29, %34, %39, %44 in 0 : vector<8x256xf32>, vector<8x256xf32>, vector<8x256xf32>, vector<8x256xf32>, vector<8x256xf32>, vector<8x256xf32>, vector<8x256xf32>, vector<8x256xf32>, vector<8x256xf32> -> vector<72x256xf32>
    %cst = arith.constant dense<0.000000e+00> : vector<8x256xf32>
    %46 = tpu.matmul %0, %45, %cst {dimension_numbers = #tpu.dot_dimension_numbers<[1], [0], [0], [1], [0, 0, 1, 1], [], []>} : vector<8x72xf32>, vector<72x256xf32>, vector<8x256xf32> -> vector<8x256xf32>
    %c8_i32 = arith.constant 8 : i32
    %47 = arith.muli %c0_i32, %c8_i32 : i32
    %48 = tpu.assume_multiple %47, 8 : i32
    %49 = arith.index_cast %48 : i32 to index
    %c0_6 = arith.constant 0 : index
    %50 = vector.load %arg6[%49, %c0_6] : memref<8x256xf32, #tpu.memory_space<vmem>>, vector<8x256xf32>
    tpu.vector_store %arg6[%49, %c0_6], %46 {strides = array<i32>} : memref<8x256xf32, #tpu.memory_space<vmem>>, vector<8x256xf32>,
    %c1_i32_7 = arith.constant 1 : i32
    %c0_8 = arith.constant 0 : index
    %c0_9 = arith.constant 0 : index
    %51 = vector.load %arg6[%c0_8, %c0_9] : memref<8x256xf32, #tpu.memory_space<vmem>>, vector<8x256xf32>
    %c0_10 = arith.constant 0 : index
    %c0_11 = arith.constant 0 : index
    %52 = vector.load %arg4[%c0_10, %c0_11] : memref<256x1024xf32, #tpu.memory_space<vmem>>, vector<256x1024xf32>
    %cst_12 = arith.constant dense<0.000000e+00> : vector<8x1024xf32>
    %53 = tpu.matmul %51, %52, %cst_12 {dimension_numbers = #tpu.dot_dimension_numbers<[1], [0], [0], [1], [0, 0, 1, 1], [], []>} : vector<8x256xf32>, vector<256x1024xf32>, vector<8x1024xf32> -> vector<8x1024xf32>
    %54 = vector.shape_cast %53 : vector<8x1024xf32> to vector<1x8x1024xf32>
    %c0_13 = arith.constant 0 : index
    %c0_14 = arith.constant 0 : index
    %c0_15 = arith.constant 0 : index
    %55 = vector.load %arg5[%c0_13, %c0_14, %c0_15] : memref<1x8x1024xf32, #tpu.memory_space<vmem>>, vector<1x8x1024xf32>
    tpu.vector_store %arg5[%c0_13, %c0_14, %c0_15], %54 {strides = array<i32>} : memref<1x8x1024xf32, #tpu.memory_space<vmem>>, vector<1x8x1024xf32>,
    return
  }
  func.func @transform_0(%arg0: i32) -> (i32, i32, i32) {
    %c0_i32 = arith.constant 0 : i32
    %c0_i32_0 = arith.constant 0 : i32
    %c0_i32_1 = arith.constant 0 : i32
    return %arg0, %c0_i32, %c0_i32_0 : i32, i32, i32
  }
  func.func @transform_1(%arg0: i32) -> (i32, i32) {
    %c0_i32 = arith.constant 0 : i32
    %c0_i32_0 = arith.constant 0 : i32
    %c0_i32_1 = arith.constant 0 : i32
    return %c0_i32, %c0_i32_0 : i32, i32
  }
  func.func @transform_2(%arg0: i32) -> (i32, i32, i32) {
    %c0_i32 = arith.constant 0 : i32
    %c0_i32_0 = arith.constant 0 : i32
    %c0_i32_1 = arith.constant 0 : i32
    %c0_i32_2 = arith.constant 0 : i32
    return %c0_i32, %c0_i32_0, %c0_i32_1 : i32, i32, i32
  }
  func.func @transform_3(%arg0: i32) -> (i32, i32) {
    %c0_i32 = arith.constant 0 : i32
    %c0_i32_0 = arith.constant 0 : i32
    %c0_i32_1 = arith.constant 0 : i32
    return %c0_i32, %c0_i32_0 : i32, i32
  }
  func.func @transform_4(%arg0: i32) -> (i32, i32, i32) {
    %c0_i32 = arith.constant 0 : i32
    %c0_i32_0 = arith.constant 0 : i32
    %c0_i32_1 = arith.constant 0 : i32
    return %arg0, %c0_i32, %c0_i32_0 : i32, i32, i32
  }
}

</mosaic_0001>

<llo_original>
// kernel: tpu_custom_call.1
$region0: #{tpu_custom_call.1}
  #allocation0 [shape = 'u32[]', space=smem, size = 0x4, offset = 0x4, fixed_abs, tag = 'smem constant byte address 0x4 - core index']
  #allocation1 [shape = 'u32[72,128]{1,0:T(1,128)}', space=vmem, size = 0x9000, scoped, tag = 'internal scratch']
  #allocation2 [shape = 'f32[8,256]{1,0:T(8,128)}', space=vmem, size = 0x2000, scoped, tag = 'scratch operand']
  %s0 = inlined_call_operand.hbm [shape: f32[2,8,256], index: 0, kind: input, shape index: {}]
  %s1 = inlined_call_operand.hbm [shape: f32[8,72], index: 1, kind: input, shape index: {}]
  %s2 = inlined_call_operand.hbm [shape: f32[9,1,256], index: 2, kind: input, shape index: {}]
  %s3 = inlined_call_operand.hbm [shape: f32[256,1024], index: 3, kind: input, shape index: {}]
  %s4 = inlined_call_operand.hbm [shape: f32[2,8,1024], index: 4, kind: output, shape index: {}]
  %s5 = sld [smem:[#allocation0]]
  $region65: #{tpu_custom_call.1} parent=0
    _
  %s7 = ssub.s32 1, %s5
  %s8 = scalar_select 0, %s7, %s5
  $region1: #{tpu_custom_call.1} parent=0
    #allocation3 [shape = 'u8[16384]{0}', space=vmem, size = 0x4000, scoped, tag = 'input window, operand 0']
    #allocation4 [shape = 's32[2]{0}', space=sflag, size = 0x8, scoped, tag = 'scoped memory for tpu_custom_call.1']
    #allocation5 [shape = 's32[2]{0}', space=sflag, size = 0x8, scoped, tag = 'scoped memory for tpu_custom_call.1']
    #allocation6 [shape = 'u8[4096]{0}', space=vmem, size = 0x1000, scoped, tag = 'input window, operand 1, single buffered']
    #allocation7 [shape = 's32[1]{0}', space=sflag, size = 0x4, scoped, tag = 'scoped memory for tpu_custom_call.1']
    #allocation8 [shape = 'u8[9216]{0}', space=vmem, size = 0x2400, scoped, tag = 'input window, operand 2, single buffered']
    #allocation9 [shape = 'u8[1048576]{0}', space=vmem, size = 0x100000, scoped, tag = 'input window, operand 3, single buffered']
    #allocation10 [shape = 's32[1]{0}', space=sflag, size = 0x4, scoped, tag = 'scoped memory for tpu_custom_call.1']
    #allocation11 [shape = 'u8[65536]{0}', space=vmem, size = 0x10000, scoped, tag = 'output window, operand 0']
    %9 = vsyncpa [#allocation4], 0
    %s10 = scalar_lea.sflag [#allocation4], 1
    %11 = vsyncpa %s10, 0
    %12 = vsyncpa [#allocation7], 0
    %13 = vsyncpa [#allocation10], 0
    %14 = vsyncpa [#allocation5], 0
    %s15 = scalar_lea.sflag [#allocation5], 1
    %16 = vsyncpa %s15, 0
    loop: start=0, step=1, limit=4
    $region2: #{tpu_custom_call.1} parent=1 // loop_pre_header
      _
    $region3: #{tpu_custom_call.1} parent=1 // loop_header
      %s18 = sphi 0, %s22
      %p19 = scmp.ge.s32.totalorder %s18, 4
      %s28 = sphi 0, %s30
      %s31 = sphi 0, %s28
      %s32 = sphi 0, %s31
      %s48 = sphi 0, %s32
      %s52 = sphi 0, %s52
      %s54 = sphi 0, %s52
      %s55 = sphi 0, %s54
      %s69 = sphi 0, %s55
      %s73 = sphi 0, %s73
      %s75 = sphi 0, %s73
      %s76 = sphi 0, %s75
      %s90 = sphi 0, %s76
      %s94 = sphi 0, %s94
      %s96 = sphi 0, %s94
      %s97 = sphi 0, %s96
      %s111 = sphi 0, %s97
      %s117 = sphi 0, %s119
      %s120 = sphi 0, %s117
      %s121 = sphi 0, %s120
      %s137 = sphi 0, %s121
    $region4: #{tpu_custom_call.1} parent=1 // loop_header_branch
      %21 = sbr.rel (%p19) target = $region8
    $region5: #{tpu_custom_call.1} parent=1 // loop_body
      %s23 = ssub.s32 %s18, 1
      %s24 = ssub.s32 %s18, 2
      %s25 = sadd.s32 %s18, 1
      %s26 = ssub.s32 %s18, %s25
      %p27 = scmp.eq.s32.totalorder %s26, 0
      %s29 = sadd.s32 %s28, 1
      %s30 = scalar_select %p27, %s28, %s29
      %p33 = pneg %p27
      %p34 = scmp.eq.s32.totalorder %s18, 1
      %p35 = por %p33, %p34
      %p36 = scmp.ne.s32.totalorder %s28, %s31
      %p37 = scmp.eq.s32.totalorder %s18, 0
      %p38 = por %p36, %p37
      %p39 = scmp.ne.s32.totalorder %s28, %s31
      %p40 = scmp.eq.s32.totalorder %s23, 1
      %p41 = por %p39, %p40
      %p42 = scmp.ne.s32.totalorder %s31, %s32
      %p43 = scmp.eq.s32.totalorder %s23, 0
      %p44 = por %p42, %p43
      %p45 = scmp.ne.s32.totalorder %s31, %s32
      %p46 = scmp.eq.s32.totalorder %s24, 1
      %p47 = por %p45, %p46
      %p49 = scmp.ne.s32.totalorder %s32, %s48
      %p50 = scmp.eq.s32.totalorder %s24, 0
      %p51 = por %p49, %p50
      %s53 = sadd.s32 %s52, 1
      %p56 = scmp.eq.s32.totalorder %s18, 1
      %p57 = scmp.ne.s32.totalorder %s52, %s54
      %p58 = scmp.eq.s32.totalorder %s18, 0
      %p59 = por %p57, %p58
      %p60 = scmp.ne.s32.totalorder %s52, %s54
      %p61 = scmp.eq.s32.totalorder %s23, 1
      %p62 = por %p60, %p61
      %p63 = scmp.ne.s32.totalorder %s54, %s55
      %p64 = scmp.eq.s32.totalorder %s23, 0
      %p65 = por %p63, %p64
      %p66 = scmp.ne.s32.totalorder %s54, %s55
      %p67 = scmp.eq.s32.totalorder %s24, 1
      %p68 = por %p66, %p67
      %p70 = scmp.ne.s32.totalorder %s55, %s69
      %p71 = scmp.eq.s32.totalorder %s24, 0
      %p72 = por %p70, %p71
      %s74 = sadd.s32 %s73, 1
      %p77 = scmp.eq.s32.totalorder %s18, 1
      %p78 = scmp.ne.s32.totalorder %s73, %s75
      %p79 = scmp.eq.s32.totalorder %s18, 0
      %p80 = por %p78, %p79
      %p81 = scmp.ne.s32.totalorder %s73, %s75
      %p82 = scmp.eq.s32.totalorder %s23, 1
      %p83 = por %p81, %p82
      %p84 = scmp.ne.s32.totalorder %s75, %s76
      %p85 = scmp.eq.s32.totalorder %s23, 0
      %p86 = por %p84, %p85
      %p87 = scmp.ne.s32.totalorder %s75, %s76
      %p88 = scmp.eq.s32.totalorder %s24, 1
      %p89 = por %p87, %p88
      %p91 = scmp.ne.s32.totalorder %s76, %s90
      %p92 = scmp.eq.s32.totalorder %s24, 0
      %p93 = por %p91, %p92
      %s95 = sadd.s32 %s94, 1
      %p98 = scmp.eq.s32.totalorder %s18, 1
      %p99 = scmp.ne.s32.totalorder %s94, %s96
      %p100 = scmp.eq.s32.totalorder %s18, 0
      %p101 = por %p99, %p100
      %p102 = scmp.ne.s32.totalorder %s94, %s96
      %p103 = scmp.eq.s32.totalorder %s23, 1
      %p104 = por %p102, %p103
      %p105 = scmp.ne.s32.totalorder %s96, %s97
      %p106 = scmp.eq.s32.totalorder %s23, 0
      %p107 = por %p105, %p106
      %p108 = scmp.ne.s32.totalorder %s96, %s97
      %p109 = scmp.eq.s32.totalorder %s24, 1
      %p110 = por %p108, %p109
      %p112 = scmp.ne.s32.totalorder %s97, %s111
      %p113 = scmp.eq.s32.totalorder %s24, 0
      %p114 = por %p112, %p113
      %s115 = ssub.s32 %s18, %s25
      %p116 = scmp.eq.s32.totalorder %s115, 0
      %s118 = sadd.s32 %s117, 1
      %s119 = scalar_select %p116, %s117, %s118
      %p122 = pneg %p116
      %p123 = scmp.eq.s32.totalorder %s18, 1
      %p124 = por %p122, %p123
      %p125 = scmp.ne.s32.totalorder %s117, %s120
      %p126 = scmp.eq.s32.totalorder %s18, 0
      %p127 = por %p125, %p126
      %p128 = scmp.ne.s32.totalorder %s117, %s120
      %p129 = scmp.eq.s32.totalorder %s23, 1
      %p130 = por %p128, %p129
      %p131 = scmp.ne.s32.totalorder %s120, %s121
      %p132 = scmp.eq.s32.totalorder %s23, 0
      %p133 = por %p131, %p132
      %p134 = scmp.ne.s32.totalorder %s120, %s121
      %p135 = scmp.eq.s32.totalorder %s24, 1
      %p136 = por %p134, %p135
      %p138 = scmp.ne.s32.totalorder %s121, %s137
      %p139 = scmp.eq.s32.totalorder %s24, 0
      %p140 = por %p138, %p139
      %p141 = scmp.le.s32.totalorder 1, %s18
      %p142 = scmp.lt.s32.totalorder %s18, 3
      %p143 = pnand %p141, %p142
      %p144 = pneg %p143
      // Predicated region
      $region9: #{tpu_custom_call.1} parent=5 // pred_check
        _
      $region10: #{tpu_custom_call.1} parent=5 // pred_check_branch
        %146 = sbr.rel (%p143) target = $region12
      $region11: #{tpu_custom_call.1} parent=5 // pred_region
        %s147 = ssub.s32 %s18, 1
        // Predicated region
        $region13: #{tpu_custom_call.1} parent=11 // pred_check
          %p148 = pneg %p65
        $region14: #{tpu_custom_call.1} parent=11 // pred_check_branch
          %150 = sbr.rel (%p148) target = $region16
        $region15: #{tpu_custom_call.1} parent=11 // pred_region
          %152 = vsyncadd [#allocation7], 0
          %s154 = sshll.u32 %s1, 4
          %s155 = int_to_ptr.hbm [resolvable:$true] %s154
          %s156 = sshll.u32 [#allocation6], 4
          %s157 = int_to_ptr.vmem [resolvable:$true] %s156
          %159 = dma.hbm_to_vmem [thread:$0]  %s155, 128, %s157, [#allocation7]
        $region16: #{tpu_custom_call.1} parent=11 // pred_fallthru
          _
        // Predicated region
        $region17: #{tpu_custom_call.1} parent=11 // pred_check
          %p160 = pneg %p86
        $region18: #{tpu_custom_call.1} parent=11 // pred_check_branch
          %162 = sbr.rel (%p160) target = $region20
        $region19: #{tpu_custom_call.1} parent=11 // pred_region
          %164 = vsyncadd [#allocation7], 0
          %s165 = sshll.u32 %s2, 4
          %s166 = int_to_ptr.hbm [resolvable:$true] %s165
          %s167 = sshll.u32 [#allocation8], 4
          %s168 = int_to_ptr.vmem [resolvable:$true] %s167
          %173 = dma.hbm_to_vmem [thread:$0]  %s166, 288, %s168, [#allocation7], 32, 32, 2
        $region20: #{tpu_custom_call.1} parent=11 // pred_fallthru
          _
        // Predicated region
        $region21: #{tpu_custom_call.1} parent=11 // pred_check
          %p174 = pneg %p107
        $region22: #{tpu_custom_call.1} parent=11 // pred_check_branch
          %176 = sbr.rel (%p174) target = $region24
        $region23: #{tpu_custom_call.1} parent=11 // pred_region
          %178 = vsyncadd [#allocation10], 0
          %s179 = sshll.u32 %s3, 4
          %s180 = int_to_ptr.hbm [resolvable:$true] %s179
          %s181 = sshll.u32 [#allocation9], 4
          %s182 = int_to_ptr.vmem [resolvable:$true] %s181
          %187 = dma.hbm_to_vmem [thread:$0]  %s180, 32768, %s182, [#allocation10], 1024, 1024, 64
        $region24: #{tpu_custom_call.1} parent=11 // pred_fallthru
          _
      $region12: #{tpu_custom_call.1} parent=5 // pred_fallthru
        _
      %p188 = scmp.lt.s32.totalorder %s18, 2
      // Predicated region
      $region25: #{tpu_custom_call.1} parent=5 // pred_check
        %p189 = pneg %p188
      $region26: #{tpu_custom_call.1} parent=5 // pred_check_branch
        %191 = sbr.rel (%p189) target = $region28
      $region27: #{tpu_custom_call.1} parent=5 // pred_region
        // Predicated region
        $region29: #{tpu_custom_call.1} parent=27 // pred_check
          %p192 = pneg %p38
        $region30: #{tpu_custom_call.1} parent=27 // pred_check_branch
          %194 = sbr.rel (%p192) target = $region32
        $region31: #{tpu_custom_call.1} parent=27 // pred_region
          %s195 = sand.u32 %s28, 1
          %s196 = scalar_lea.sflag [#allocation4], %s195
          %s197 = sand.u32 %s28, 1
          %s198 = smul.addr %s197, 16
          %s199 = scalar_lea.vmem [#allocation3], %s198
          %201 = vsyncadd %s196, 0
          %s202 = smul.addr %s18, 2
          %s203 = smul.addr %s202, 8
          %s204 = scalar_lea.hbm %s0, %s203
          %s206 = sshll.u32 %s204, 4
          %s207 = int_to_ptr.hbm [resolvable:$true] %s206
          %s208 = sshll.u32 %s199, 4
          %s209 = int_to_ptr.vmem [resolvable:$true] %s208
          %211 = dma.hbm_to_vmem [thread:$0]  %s207, 256, %s209, %s196
        $region32: #{tpu_custom_call.1} parent=27 // pred_fallthru
          _
      $region28: #{tpu_custom_call.1} parent=5 // pred_fallthru
        _
      %p212 = scmp.le.s32.totalorder 1, %s18
      %p213 = scmp.lt.s32.totalorder %s18, 3
      %p214 = pnand %p212, %p213
      %p215 = pneg %p214
      // Predicated region
      $region33: #{tpu_custom_call.1} parent=5 // pred_check
        _
      $region34: #{tpu_custom_call.1} parent=5 // pred_check_branch
        %217 = sbr.rel (%p214) target = $region36
      $region35: #{tpu_custom_call.1} parent=5 // pred_region
        %s218 = ssub.s32 %s18, 1
        %s219 = sand.u32 %s31, 1
        %s220 = scalar_lea.sflag [#allocation4], %s219
        %s221 = sand.u32 %s31, 1
        %s222 = smul.addr %s221, 16
        %s223 = scalar_lea.vmem [#allocation3], %s222
        // Predicated region
        $region37: #{tpu_custom_call.1} parent=35 // pred_check
          %p224 = pneg %p44
        $region38: #{tpu_custom_call.1} parent=35 // pred_check_branch
          %226 = sbr.rel (%p224) target = $region40
        $region39: #{tpu_custom_call.1} parent=35 // pred_region
          %228 = dma.done %s220, 256
        $region40: #{tpu_custom_call.1} parent=35 // pred_fallthru
          _
        // Predicated region
        $region41: #{tpu_custom_call.1} parent=35 // pred_check
          %p229 = pneg %p65
        $region42: #{tpu_custom_call.1} parent=35 // pred_check_branch
          %231 = sbr.rel (%p229) target = $region44
        $region43: #{tpu_custom_call.1} parent=35 // pred_region
          %233 = dma.done [#allocation7], 128
        $region44: #{tpu_custom_call.1} parent=35 // pred_fallthru
          _
        // Predicated region
        $region45: #{tpu_custom_call.1} parent=35 // pred_check
          %p234 = pneg %p86
        $region46: #{tpu_custom_call.1} parent=35 // pred_check_branch
          %236 = sbr.rel (%p234) target = $region48
        $region47: #{tpu_custom_call.1} parent=35 // pred_region
          %238 = dma.done [#allocation7], 288
        $region48: #{tpu_custom_call.1} parent=35 // pred_fallthru
          _
        // Predicated region
        $region49: #{tpu_custom_call.1} parent=35 // pred_check
          %p239 = pneg %p107
        $region50: #{tpu_custom_call.1} parent=35 // pred_check_branch
          %241 = sbr.rel (%p239) target = $region52
        $region51: #{tpu_custom_call.1} parent=35 // pred_region
          %243 = dma.done [#allocation10], 32768
        $region52: #{tpu_custom_call.1} parent=35 // pred_fallthru
          _
        %s244 = sand.u32 %s31, 1
        %s245 = scalar_lea.sflag [#allocation4], %s244
        %s246 = sand.u32 %s31, 1
        %s247 = smul.addr %s246, 16
        %s248 = scalar_lea.vmem [#allocation3], %s247
        %p249 = pneg %p44
        %p250 = pneg %p41
        %p251 = pneg %p65
        %p252 = pneg %p62
        %p253 = pneg %p86
        %p254 = pneg %p83
        %p255 = pneg %p107
        %p256 = pneg %p104
        %p257 = pneg %p133
        %p258 = pneg %p130
        %s259 = sand.u32 %s120, 1
        %s260 = scalar_lea.sflag [#allocation5], %s259
        %s261 = sand.u32 %s120, 1
        %s262 = smul.addr %s261, 64
        %s263 = scalar_lea.vmem [#allocation11], %s262
        %v264 = vld [vmem:[#allocation6] sm:$0xff]
        %v265 = vld [vmem:[#allocation8] sm:$0x3]
        %v266 = vld [vmem:[#allocation8 + $0x2] sm:$0x3]
        %v267 = vld [vmem:[#allocation8 + $0x4] sm:$0x3]
        %v268 = vld [vmem:[#allocation8 + $0x6] sm:$0x3]
        %v269 = vld [vmem:[#allocation8 + $0xa] sm:$0x3]
        %v270 = vld [vmem:[#allocation8 + $0xc] sm:$0x3]
        %v271 = vld [vmem:[#allocation8 + $0xe] sm:$0x3]
        %v272 = vld [vmem:[#allocation8 + $0x10] sm:$0x3]
        %v273 = vld [vmem:[%s223] sm:$0xff]
        %v274 = vld [vmem:[%s223 + $0x8] sm:$0xff]
        %275 = vrot.lane.b32.xlu0 %v273, 17
        %v276 = vpop.permute.xlu0 %275
        %277 = vrot.lane.b32.xlu0 %v274, 17
        %v278 = vpop.permute.xlu0 %277
        %v279 = vlaneseq
        %v280 = vand.u32 %v279, 127
        %vm281 = vcmp.lt.s32.totalorder %v280, 17
        %v282 = vsel %vm281, %v276, %v278
        %v283 = vsel %vm281, %v278, %v276
        %v285 = vperm.slane %v265, 0
        %v286 = vperm.slane %v265, 1
        %v289 = vmul.f32 %v283, %v285
        %v290 = vmul.f32 %v282, %v286
        %291 = vrot.lane.b32.xlu0 %v273, 16
        %v292 = vpop.permute.xlu0 %291
        %293 = vrot.lane.b32.xlu0 %v274, 16
        %v294 = vpop.permute.xlu0 %293
        %vm295 = vcmp.lt.s32.totalorder %v280, 16
        %v296 = vsel %vm295, %v292, %v294
        %v297 = vsel %vm295, %v294, %v292
        %v299 = vperm.slane %v266, 0
        %v300 = vperm.slane %v266, 1
        %v303 = vmul.f32 %v297, %v299
        %v304 = vmul.f32 %v296, %v300
        %305 = vrot.lane.b32.xlu0 %v273, 15
        %v306 = vpop.permute.xlu0 %305
        %307 = vrot.lane.b32.xlu0 %v274, 15
        %v308 = vpop.permute.xlu0 %307
        %vm309 = vcmp.lt.s32.totalorder %v280, 15
        %v310 = vsel %vm309, %v306, %v308
        %v311 = vsel %vm309, %v308, %v306
        %v313 = vperm.slane %v267, 0
        %v314 = vperm.slane %v267, 1
        %v317 = vmul.f32 %v311, %v313
        %v318 = vmul.f32 %v310, %v314
        %319 = vrot.lane.b32.xlu0 %v273, 1
        %v320 = vpop.permute.xlu0 %319
        %321 = vrot.lane.b32.xlu0 %v274, 1
        %v322 = vpop.permute.xlu0 %321
        %vm323 = vcmp.lt.s32.totalorder %v280, 1
        %v324 = vsel %vm323, %v320, %v322
        %v325 = vsel %vm323, %v322, %v320
        %v327 = vperm.slane %v268, 0
        %v328 = vperm.slane %v268, 1
        %v331 = vmul.f32 %v325, %v327
        %v332 = vmul.f32 %v324, %v328
        %333 = vrot.lane.b32.xlu0 %v273, 127
        %v334 = vpop.permute.xlu0 %333
        %335 = vrot.lane.b32.xlu0 %v274, 127
        %v336 = vpop.permute.xlu0 %335
        %vm337 = vcmp.lt.s32.totalorder %v280, 127
        %v338 = vsel %vm337, %v334, %v336
        %v339 = vsel %vm337, %v336, %v334
        %v341 = vperm.slane %v269, 0
        %v342 = vperm.slane %v269, 1
        %v345 = vmul.f32 %v338, %v341
        %v346 = vmul.f32 %v339, %v342
        %347 = vrot.lane.b32.xlu0 %v273, 113
        %v348 = vpop.permute.xlu0 %347
        %349 = vrot.lane.b32.xlu0 %v274, 113
        %v350 = vpop.permute.xlu0 %349
        %vm351 = vcmp.lt.s32.totalorder %v280, 113
        %v352 = vsel %vm351, %v348, %v350
        %v353 = vsel %vm351, %v350, %v348
        %v355 = vperm.slane %v270, 0
        %v356 = vperm.slane %v270, 1
        %v359 = vmul.f32 %v352, %v355
        %v360 = vmul.f32 %v353, %v356
        %361 = vrot.lane.b32.xlu0 %v273, 112
        %v362 = vpop.permute.xlu0 %361
        %363 = vrot.lane.b32.xlu0 %v274, 112
        %v364 = vpop.permute.xlu0 %363
        %vm365 = vcmp.lt.s32.totalorder %v280, 112
        %v366 = vsel %vm365, %v362, %v364
        %v367 = vsel %vm365, %v364, %v362
        %v369 = vperm.slane %v271, 0
        %v370 = vperm.slane %v271, 1
        %v373 = vmul.f32 %v366, %v369
        %v374 = vmul.f32 %v367, %v370
        %375 = vrot.lane.b32.xlu0 %v273, 111
        %v376 = vpop.permute.xlu0 %375
        %377 = vrot.lane.b32.xlu0 %v274, 111
        %v378 = vpop.permute.xlu0 %377
        %vm379 = vcmp.lt.s32.totalorder %v280, 111
        %v380 = vsel %vm379, %v376, %v378
        %v381 = vsel %vm379, %v378, %v376
        %v383 = vperm.slane %v272, 0
        %v384 = vperm.slane %v272, 1
        %v387 = vmul.f32 %v380, %v383
        %v388 = vmul.f32 %v381, %v384
        %vm389 = vcmask 588800
        %v391 = vsel %vm389, %v264, 0
        %393 = vmatpush.msra.mxu0 0.0
        %394 = vmatpush.msra.mxu0 0.0
        %395 = vmatpush.msra.mxu0 0.0
        %396 = vmatpush.msra.mxu0 0.0
        %397 = vmatpush.msra.mxu0 0.0
        %398 = vmatpush.msra.mxu0 0.0
        %399 = vmatpush.msra.mxu0 0.0
        %400 = vmatpush.msra.mxu0 %v387
        %401 = vmatpush.msra.mxu0 %v373
        %402 = vmatpush.msra.mxu0 %v359
        %403 = vmatpush.msra.mxu0 %v345
        %404 = vmatpush.msra.mxu0 %v273
        %405 = vmatpush.msra.mxu0 %v331
        %406 = vmatpush.msra.mxu0 %v317
        %407 = vmatpush.msra.mxu0 %v303
        %408 = vmatpush.msra.mxu0 %v289
        %409 = vmatmul.f32.gmra.mxu0 %v391
        %v410 = vpop.f32.mrf.mxu0
        %v411 = vadd.f32 0.0, %v410
        %412 = vdwg.mxu0
        %413 = vmatpush.msra.mxu0 0.0
        %414 = vmatpush.msra.mxu0 0.0
        %415 = vmatpush.msra.mxu0 0.0
        %416 = vmatpush.msra.mxu0 0.0
        %417 = vmatpush.msra.mxu0 0.0
        %418 = vmatpush.msra.mxu0 0.0
        %419 = vmatpush.msra.mxu0 0.0
        %420 = vmatpush.msra.mxu0 %v388
        %421 = vmatpush.msra.mxu0 %v374
        %422 = vmatpush.msra.mxu0 %v360
        %423 = vmatpush.msra.mxu0 %v346
        %424 = vmatpush.msra.mxu0 %v274
        %425 = vmatpush.msra.mxu0 %v332
        %426 = vmatpush.msra.mxu0 %v318
        %427 = vmatpush.msra.mxu0 %v304
        %428 = vmatpush.msra.mxu0 %v290
        %429 = vmatmul.f32.gmra.mxu0 %v391
        %v430 = vpop.f32.mrf.mxu0
        %v431 = vadd.f32 0.0, %v430
        %432 = vdwg.mxu0
        %s433 = smul.u32 0, 2
        %s434 = smul.addr %s433, 8
        %s435 = scalar_lea.vmem [#allocation2], %s434
        %436 = vst [vmem:[%s435] sm:$0xff] %v411
        %437 = vst [vmem:[%s435 + $0x8] sm:$0xff] %v431
        %v438 = vld [vmem:[#allocation2] sm:$0xff]
        %v439 = vld [vmem:[#allocation2 + $0x8] sm:$0xff]
        %v440 = vld [vmem:[#allocation9] sm:$0xff]
        %v441 = vld [vmem:[#allocation9 + $0x8] sm:$0xff]
        %v442 = vld [vmem:[#allocation9 + $0x10] sm:$0xff]
        %v443 = vld [vmem:[#allocation9 + $0x18] sm:$0xff]
        %v444 = vld [vmem:[#allocation9 + $0x20] sm:$0xff]
        %v445 = vld [vmem:[#allocation9 + $0x28] sm:$0xff]
        %v446 = vld [vmem:[#allocation9 + $0x30] sm:$0xff]
        %v447 = vld [vmem:[#allocation9 + $0x38] sm:$0xff]
        %v448 = vld [vmem:[#allocation9 + $0x40] sm:$0xff]
        %v449 = vld [vmem:[#allocation9 + $0x48] sm:$0xff]
        %v450 = vld [vmem:[#allocation9 + $0x50] sm:$0xff]
        %v451 = vld [vmem:[#allocation9 + $0x58] sm:$0xff]
        %v452 = vld [vmem:[#allocation9 + $0x60] sm:$0xff]
        %v453 = vld [vmem:[#allocation9 + $0x68] sm:$0xff]
        %v454 = vld [vmem:[#allocation9 + $0x70] sm:$0xff]
        %v455 = vld [vmem:[#allocation9 + $0x78] sm:$0xff]
        %v456 = vld [vmem:[#allocation9 + $0x80] sm:$0xff]
        %v457 = vld [vmem:[#allocation9 + $0x88] sm:$0xff]
        %v458 = vld [vmem:[#allocation9 + $0x90] sm:$0xff]
        %v459 = vld [vmem:[#allocation9 + $0x98] sm:$0xff]
        %v460 = vld [vmem:[#allocation9 + $0xa0] sm:$0xff]
        %v461 = vld [vmem:[#allocation9 + $0xa8] sm:$0xff]
        %v462 = vld [vmem:[#allocation9 + $0xb0] sm:$0xff]
        %v463 = vld [vmem:[#allocation9 + $0xb8] sm:$0xff]
        %v464 = vld [vmem:[#allocation9 + $0xc0] sm:$0xff]
        %v465 = vld [vmem:[#allocation9 + $0xc8] sm:$0xff]
        %v466 = vld [vmem:[#allocation9 + $0xd0] sm:$0xff]
        %v467 = vld [vmem:[#allocation9 + $0xd8] sm:$0xff]
        %v468 = vld [vmem:[#allocation9 + $0xe0] sm:$0xff]
        %v469 = vld [vmem:[#allocation9 + $0xe8] sm:$0xff]
        %v470 = vld [vmem:[#allocation9 + $0xf0] sm:$0xff]
        %v471 = vld [vmem:[#allocation9 + $0xf8] sm:$0xff]
        %v472 = vld [vmem:[#allocation9 + $0x100] sm:$0xff]
        %v473 = vld [vmem:[#allocation9 + $0x108] sm:$0xff]
        %v474 = vld [vmem:[#allocation9 + $0x110] sm:$0xff]
        %v475 = vld [vmem:[#allocation9 + $0x118] sm:$0xff]
        %v476 = vld [vmem:[#allocation9 + $0x120] sm:$0xff]
        %v477 = vld [vmem:[#allocation9 + $0x128] sm:$0xff]
        %v478 = vld [vmem:[#allocation9 + $0x130] sm:$0xff]
        %v479 = vld [vmem:[#allocation9 + $0x138] sm:$0xff]
        %v480 = vld [vmem:[#allocation9 + $0x140] sm:$0xff]
        %v481 = vld [vmem:[#allocation9 + $0x148] sm:$0xff]
        %v482 = vld [vmem:[#allocation9 + $0x150] sm:$0xff]
        %v483 = vld [vmem:[#allocation9 + $0x158] sm:$0xff]
        %v484 = vld [vmem:[#allocation9 + $0x160] sm:$0xff]
        %v485 = vld [vmem:[#allocation9 + $0x168] sm:$0xff]
        %v486 = vld [vmem:[#allocation9 + $0x170] sm:$0xff]
        %v487 = vld [vmem:[#allocation9 + $0x178] sm:$0xff]
        %v488 = vld [vmem:[#allocation9 + $0x180] sm:$0xff]
        %v489 = vld [vmem:[#allocation9 + $0x188] sm:$0xff]
        %v490 = vld [vmem:[#allocation9 + $0x190] sm:$0xff]
        %v491 = vld [vmem:[#allocation9 + $0x198] sm:$0xff]
        %v492 = vld [vmem:[#allocation9 + $0x1a0] sm:$0xff]
        %v493 = vld [vmem:[#allocation9 + $0x1a8] sm:$0xff]
        %v494 = vld [vmem:[#allocation9 + $0x1b0] sm:$0xff]
        %v495 = vld [vmem:[#allocation9 + $0x1b8] sm:$0xff]
        %v496 = vld [vmem:[#allocation9 + $0x1c0] sm:$0xff]
        %v497 = vld [vmem:[#allocation9 + $0x1c8] sm:$0xff]
        %v498 = vld [vmem:[#allocation9 + $0x1d0] sm:$0xff]
        %v499 = vld [vmem:[#allocation9 + $0x1d8] sm:$0xff]
        %v500 = vld [vmem:[#allocation9 + $0x1e0] sm:$0xff]
        %v501 = vld [vmem:[#allocation9 + $0x1e8] sm:$0xff]
        %v502 = vld [vmem:[#allocation9 + $0x1f0] sm:$0xff]
        %v503 = vld [vmem:[#allocation9 + $0x1f8] sm:$0xff]
        %v504 = vld [vmem:[#allocation9 + $0x200] sm:$0xff]
        %v505 = vld [vmem:[#allocation9 + $0x208] sm:$0xff]
        %v506 = vld [vmem:[#allocation9 + $0x210] sm:$0xff]
        %v507 = vld [vmem:[#allocation9 + $0x218] sm:$0xff]
        %v508 = vld [vmem:[#allocation9 + $0x220] sm:$0xff]
        %v509 = vld [vmem:[#allocation9 + $0x228] sm:$0xff]
        %v510 = vld [vmem:[#allocation9 + $0x230] sm:$0xff]
        %v511 = vld [vmem:[#allocation9 + $0x238] sm:$0xff]
        %v512 = vld [vmem:[#allocation9 + $0x240] sm:$0xff]
        %v513 = vld [vmem:[#allocation9 + $0x248] sm:$0xff]
        %v514 = vld [vmem:[#allocation9 + $0x250] sm:$0xff]
        %v515 = vld [vmem:[#allocation9 + $0x258] sm:$0xff]
        %v516 = vld [vmem:[#allocation9 + $0x260] sm:$0xff]
        %v517 = vld [vmem:[#allocation9 + $0x268] sm:$0xff]
        %v518 = vld [vmem:[#allocation9 + $0x270] sm:$0xff]
        %v519 = vld [vmem:[#allocation9 + $0x278] sm:$0xff]
        %v520 = vld [vmem:[#allocation9 + $0x280] sm:$0xff]
        %v521 = vld [vmem:[#allocation9 + $0x288] sm:$0xff]
        %v522 = vld [vmem:[#allocation9 + $0x290] sm:$0xff]
        %v523 = vld [vmem:[#allocation9 + $0x298] sm:$0xff]
        %v524 = vld [vmem:[#allocation9 + $0x2a0] sm:$0xff]
        %v525 = vld [vmem:[#allocation9 + $0x2a8] sm:$0xff]
        %v526 = vld [vmem:[#allocation9 + $0x2b0] sm:$0xff]
        %v527 = vld [vmem:[#allocation9 + $0x2b8] sm:$0xff]
        %v528 = vld [vmem:[#allocation9 + $0x2c0] sm:$0xff]
        %v529 = vld [vmem:[#allocation9 + $0x2c8] sm:$0xff]
        %v530 = vld [vmem:[#allocation9 + $0x2d0] sm:$0xff]
        %v531 = vld [vmem:[#allocation9 + $0x2d8] sm:$0xff]
        %v532 = vld [vmem:[#allocation9 + $0x2e0] sm:$0xff]
        %v533 = vld [vmem:[#allocation9 + $0x2e8] sm:$0xff]
        %v534 = vld [vmem:[#allocation9 + $0x2f0] sm:$0xff]
        %v535 = vld [vmem:[#allocation9 + $0x2f8] sm:$0xff]
        %v536 = vld [vmem:[#allocation9 + $0x300] sm:$0xff]
        %v537 = vld [vmem:[#allocation9 + $0x308] sm:$0xff]
        %v538 = vld [vmem:[#allocation9 + $0x310] sm:$0xff]
        %v539 = vld [vmem:[#allocation9 + $0x318] sm:$0xff]
        %v540 = vld [vmem:[#allocation9 + $0x320] sm:$0xff]
        %v541 = vld [vmem:[#allocation9 + $0x328] sm:$0xff]
        %v542 = vld [vmem:[#allocation9 + $0x330] sm:$0xff]
        %v543 = vld [vmem:[#allocation9 + $0x338] sm:$0xff]
        %v544 = vld [vmem:[#allocation9 + $0x340] sm:$0xff]
        %v545 = vld [vmem:[#allocation9 + $0x348] sm:$0xff]
        %v546 = vld [vmem:[#allocation9 + $0x350] sm:$0xff]
        %v547 = vld [vmem:[#allocation9 + $0x358] sm:$0xff]
        %v548 = vld [vmem:[#allocation9 + $0x360] sm:$0xff]
        %v549 = vld [vmem:[#allocation9 + $0x368] sm:$0xff]
        %v550 = vld [vmem:[#allocation9 + $0x370] sm:$0xff]
        %v551 = vld [vmem:[#allocation9 + $0x378] sm:$0xff]
        %v552 = vld [vmem:[#allocation9 + $0x380] sm:$0xff]
        %v553 = vld [vmem:[#allocation9 + $0x388] sm:$0xff]
        %v554 = vld [vmem:[#allocation9 + $0x390] sm:$0xff]
        %v555 = vld [vmem:[#allocation9 + $0x398] sm:$0xff]
        %v556 = vld [vmem:[#allocation9 + $0x3a0] sm:$0xff]
        %v557 = vld [vmem:[#allocation9 + $0x3a8] sm:$0xff]
        %v558 = vld [vmem:[#allocation9 + $0x3b0] sm:$0xff]
        %v559 = vld [vmem:[#allocation9 + $0x3b8] sm:$0xff]
        %v560 = vld [vmem:[#allocation9 + $0x3c0] sm:$0xff]
        %v561 = vld [vmem:[#allocation9 + $0x3c8] sm:$0xff]
        %v562 = vld [vmem:[#allocation9 + $0x3d0] sm:$0xff]
        %v563 = vld [vmem:[#allocation9 + $0x3d8] sm:$0xff]
        %v564 = vld [vmem:[#allocation9 + $0x3e0] sm:$0xff]
        %v565 = vld [vmem:[#allocation9 + $0x3e8] sm:$0xff]
        %v566 = vld [vmem:[#allocation9 + $0x3f0] sm:$0xff]
        %v567 = vld [vmem:[#allocation9 + $0x3f8] sm:$0xff]
        %v568 = vld [vmem:[#allocation9 + $0x400] sm:$0xff]
        %v569 = vld [vmem:[#allocation9 + $0x408] sm:$0xff]
        %v570 = vld [vmem:[#allocation9 + $0x410] sm:$0xff]
        %v571 = vld [vmem:[#allocation9 + $0x418] sm:$0xff]
        %v572 = vld [vmem:[#allocation9 + $0x420] sm:$0xff]
        %v573 = vld [vmem:[#allocation9 + $0x428] sm:$0xff]
        %v574 = vld [vmem:[#allocation9 + $0x430] sm:$0xff]
        %v575 = vld [vmem:[#allocation9 + $0x438] sm:$0xff]
        %v576 = vld [vmem:[#allocation9 + $0x440] sm:$0xff]
        %v577 = vld [vmem:[#allocation9 + $0x448] sm:$0xff]
        %v578 = vld [vmem:[#allocation9 + $0x450] sm:$0xff]
        %v579 = vld [vmem:[#allocation9 + $0x458] sm:$0xff]
        %v580 = vld [vmem:[#allocation9 + $0x460] sm:$0xff]
        %v581 = vld [vmem:[#allocation9 + $0x468] sm:$0xff]
        %v582 = vld [vmem:[#allocation9 + $0x470] sm:$0xff]
        %v583 = vld [vmem:[#allocation9 + $0x478] sm:$0xff]
        %v584 = vld [vmem:[#allocation9 + $0x480] sm:$0xff]
        %v585 = vld [vmem:[#allocation9 + $0x488] sm:$0xff]
        %v586 = vld [vmem:[#allocation9 + $0x490] sm:$0xff]
        %v587 = vld [vmem:[#allocation9 + $0x498] sm:$0xff]
        %v588 = vld [vmem:[#allocation9 + $0x4a0] sm:$0xff]
        %v589 = vld [vmem:[#allocation9 + $0x4a8] sm:$0xff]
        %v590 = vld [vmem:[#allocation9 + $0x4b0] sm:$0xff]
        %v591 = vld [vmem:[#allocation9 + $0x4b8] sm:$0xff]
        %v592 = vld [vmem:[#allocation9 + $0x4c0] sm:$0xff]
        %v593 = vld [vmem:[#allocation9 + $0x4c8] sm:$0xff]
        %v594 = vld [vmem:[#allocation9 + $0x4d0] sm:$0xff]
        %v595 = vld [vmem:[#allocation9 + $0x4d8] sm:$0xff]
        %v596 = vld [vmem:[#allocation9 + $0x4e0] sm:$0xff]
        %v597 = vld [vmem:[#allocation9 + $0x4e8] sm:$0xff]
        %v598 = vld [vmem:[#allocation9 + $0x4f0] sm:$0xff]
        %v599 = vld [vmem:[#allocation9 + $0x4f8] sm:$0xff]
        %v600 = vld [vmem:[#allocation9 + $0x500] sm:$0xff]
        %v601 = vld [vmem:[#allocation9 + $0x508] sm:$0xff]
        %v602 = vld [vmem:[#allocation9 + $0x510] sm:$0xff]
        %v603 = vld [vmem:[#allocation9 + $0x518] sm:$0xff]
        %v604 = vld [vmem:[#allocation9 + $0x520] sm:$0xff]
        %v605 = vld [vmem:[#allocation9 + $0x528] sm:$0xff]
        %v606 = vld [vmem:[#allocation9 + $0x530] sm:$0xff]
        %v607 = vld [vmem:[#allocation9 + $0x538] sm:$0xff]
        %v608 = vld [vmem:[#allocation9 + $0x540] sm:$0xff]
        %v609 = vld [vmem:[#allocation9 + $0x548] sm:$0xff]
        %v610 = vld [vmem:[#allocation9 + $0x550] sm:$0xff]
        %v611 = vld [vmem:[#allocation9 + $0x558] sm:$0xff]
        %v612 = vld [vmem:[#allocation9 + $0x560] sm:$0xff]
        %v613 = vld [vmem:[#allocation9 + $0x568] sm:$0xff]
        %v614 = vld [vmem:[#allocation9 + $0x570] sm:$0xff]
        %v615 = vld [vmem:[#allocation9 + $0x578] sm:$0xff]
        %v616 = vld [vmem:[#allocation9 + $0x580] sm:$0xff]
        %v617 = vld [vmem:[#allocation9 + $0x588] sm:$0xff]
        %v618 = vld [vmem:[#allocation9 + $0x590] sm:$0xff]
        %v619 = vld [vmem:[#allocation9 + $0x598] sm:$0xff]
        %v620 = vld [vmem:[#allocation9 + $0x5a0] sm:$0xff]
        %v621 = vld [vmem:[#allocation9 + $0x5a8] sm:$0xff]
        %v622 = vld [vmem:[#allocation9 + $0x5b0] sm:$0xff]
        %v623 = vld [vmem:[#allocation9 + $0x5b8] sm:$0xff]
        %v624 = vld [vmem:[#allocation9 + $0x5c0] sm:$0xff]
        %v625 = vld [vmem:[#allocation9 + $0x5c8] sm:$0xff]
        %v626 = vld [vmem:[#allocation9 + $0x5d0] sm:$0xff]
        %v627 = vld [vmem:[#allocation9 + $0x5d8] sm:$0xff]
        %v628 = vld [vmem:[#allocation9 + $0x5e0] sm:$0xff]
        %v629 = vld [vmem:[#allocation9 + $0x5e8] sm:$0xff]
        %v630 = vld [vmem:[#allocation9 + $0x5f0] sm:$0xff]
        %v631 = vld [vmem:[#allocation9 + $0x5f8] sm:$0xff]
        %v632 = vld [vmem:[#allocation9 + $0x600] sm:$0xff]
        %v633 = vld [vmem:[#allocation9 + $0x608] sm:$0xff]
        %v634 = vld [vmem:[#allocation9 + $0x610] sm:$0xff]
        %v635 = vld [vmem:[#allocation9 + $0x618] sm:$0xff]
        %v636 = vld [vmem:[#allocation9 + $0x620] sm:$0xff]
        %v637 = vld [vmem:[#allocation9 + $0x628] sm:$0xff]
        %v638 = vld [vmem:[#allocation9 + $0x630] sm:$0xff]
        %v639 = vld [vmem:[#allocation9 + $0x638] sm:$0xff]
        %v640 = vld [vmem:[#allocation9 + $0x640] sm:$0xff]
        %v641 = vld [vmem:[#allocation9 + $0x648] sm:$0xff]
        %v642 = vld [vmem:[#allocation9 + $0x650] sm:$0xff]
        %v643 = vld [vmem:[#allocation9 + $0x658] sm:$0xff]
        %v644 = vld [vmem:[#allocation9 + $0x660] sm:$0xff]
        %v645 = vld [vmem:[#allocation9 + $0x668] sm:$0xff]
        %v646 = vld [vmem:[#allocation9 + $0x670] sm:$0xff]
        %v647 = vld [vmem:[#allocation9 + $0x678] sm:$0xff]
        %v648 = vld [vmem:[#allocation9 + $0x680] sm:$0xff]
        %v649 = vld [vmem:[#allocation9 + $0x688] sm:$0xff]
        %v650 = vld [vmem:[#allocation9 + $0x690] sm:$0xff]
        %v651 = vld [vmem:[#allocation9 + $0x698] sm:$0xff]
        %v652 = vld [vmem:[#allocation9 + $0x6a0] sm:$0xff]
        %v653 = vld [vmem:[#allocation9 + $0x6a8] sm:$0xff]
        %v654 = vld [vmem:[#allocation9 + $0x6b0] sm:$0xff]
        %v655 = vld [vmem:[#allocation9 + $0x6b8] sm:$0xff]
        %v656 = vld [vmem:[#allocation9 + $0x6c0] sm:$0xff]
        %v657 = vld [vmem:[#allocation9 + $0x6c8] sm:$0xff]
        %v658 = vld [vmem:[#allocation9 + $0x6d0] sm:$0xff]
        %v659 = vld [vmem:[#allocation9 + $0x6d8] sm:$0xff]
        %v660 = vld [vmem:[#allocation9 + $0x6e0] sm:$0xff]
        %v661 = vld [vmem:[#allocation9 + $0x6e8] sm:$0xff]
        %v662 = vld [vmem:[#allocation9 + $0x6f0] sm:$0xff]
        %v663 = vld [vmem:[#allocation9 + $0x6f8] sm:$0xff]
        %v664 = vld [vmem:[#allocation9 + $0x700] sm:$0xff]
        %v665 = vld [vmem:[#allocation9 + $0x708] sm:$0xff]
        %v666 = vld [vmem:[#allocation9 + $0x710] sm:$0xff]
        %v667 = vld [vmem:[#allocation9 + $0x718] sm:$0xff]
        %v668 = vld [vmem:[#allocation9 + $0x720] sm:$0xff]
        %v669 = vld [vmem:[#allocation9 + $0x728] sm:$0xff]
        %v670 = vld [vmem:[#allocation9 + $0x730] sm:$0xff]
        %v671 = vld [vmem:[#allocation9 + $0x738] sm:$0xff]
        %v672 = vld [vmem:[#allocation9 + $0x740] sm:$0xff]
        %v673 = vld [vmem:[#allocation9 + $0x748] sm:$0xff]
        %v674 = vld [vmem:[#allocation9 + $0x750] sm:$0xff]
        %v675 = vld [vmem:[#allocation9 + $0x758] sm:$0xff]
        %v676 = vld [vmem:[#allocation9 + $0x760] sm:$0xff]
        %v677 = vld [vmem:[#allocation9 + $0x768] sm:$0xff]
        %v678 = vld [vmem:[#allocation9 + $0x770] sm:$0xff]
        %v679 = vld [vmem:[#allocation9 + $0x778] sm:$0xff]
        %v680 = vld [vmem:[#allocation9 + $0x780] sm:$0xff]
        %v681 = vld [vmem:[#allocation9 + $0x788] sm:$0xff]
        %v682 = vld [vmem:[#allocation9 + $0x790] sm:$0xff]
        %v683 = vld [vmem:[#allocation9 + $0x798] sm:$0xff]
        %v684 = vld [vmem:[#allocation9 + $0x7a0] sm:$0xff]
        %v685 = vld [vmem:[#allocation9 + $0x7a8] sm:$0xff]
        %v686 = vld [vmem:[#allocation9 + $0x7b0] sm:$0xff]
        %v687 = vld [vmem:[#allocation9 + $0x7b8] sm:$0xff]
        %v688 = vld [vmem:[#allocation9 + $0x7c0] sm:$0xff]
        %v689 = vld [vmem:[#allocation9 + $0x7c8] sm:$0xff]
        %v690 = vld [vmem:[#allocation9 + $0x7d0] sm:$0xff]
        %v691 = vld [vmem:[#allocation9 + $0x7d8] sm:$0xff]
        %v692 = vld [vmem:[#allocation9 + $0x7e0] sm:$0xff]
        %v693 = vld [vmem:[#allocation9 + $0x7e8] sm:$0xff]
        %v694 = vld [vmem:[#allocation9 + $0x7f0] sm:$0xff]
        %v695 = vld [vmem:[#allocation9 + $0x7f8] sm:$0xff]
        %696 = vmatpush.msra.mxu0 %v560
        %697 = vmatpush.msra.mxu0 %v552
        %698 = vmatpush.msra.mxu0 %v544
        %699 = vmatpush.msra.mxu0 %v536
        %700 = vmatpush.msra.mxu0 %v528
        %701 = vmatpush.msra.mxu0 %v520
        %702 = vmatpush.msra.mxu0 %v512
        %703 = vmatpush.msra.mxu0 %v504
        %704 = vmatpush.msra.mxu0 %v496
        %705 = vmatpush.msra.mxu0 %v488
        %706 = vmatpush.msra.mxu0 %v480
        %707 = vmatpush.msra.mxu0 %v472
        %708 = vmatpush.msra.mxu0 %v464
        %709 = vmatpush.msra.mxu0 %v456
        %710 = vmatpush.msra.mxu0 %v448
        %711 = vmatpush.msra.mxu0 %v440
        %712 = vmatmul.f32.gmra.mxu0 %v438
        %v713 = vpop.f32.mrf.mxu0
        %v714 = vadd.f32 0.0, %v713
        %715 = vdwg.mxu0
        %716 = vmatpush.msra.mxu0 %v688
        %717 = vmatpush.msra.mxu0 %v680
        %718 = vmatpush.msra.mxu0 %v672
        %719 = vmatpush.msra.mxu0 %v664
        %720 = vmatpush.msra.mxu0 %v656
        %721 = vmatpush.msra.mxu0 %v648
        %722 = vmatpush.msra.mxu0 %v640
        %723 = vmatpush.msra.mxu0 %v632
        %724 = vmatpush.msra.mxu0 %v624
        %725 = vmatpush.msra.mxu0 %v616
        %726 = vmatpush.msra.mxu0 %v608
        %727 = vmatpush.msra.mxu0 %v600
        %728 = vmatpush.msra.mxu0 %v592
        %729 = vmatpush.msra.mxu0 %v584
        %730 = vmatpush.msra.mxu0 %v576
        %731 = vmatpush.msra.mxu0 %v568
        %732 = vmatmul.f32.gmra.mxu0 %v439
        %v733 = vpop.f32.mrf.mxu0
        %v734 = vadd.f32 %v714, %v733
        %735 = vdwg.mxu0
        %736 = vmatpush.msra.mxu0 %v561
        %737 = vmatpush.msra.mxu0 %v553
        %738 = vmatpush.msra.mxu0 %v545
        %739 = vmatpush.msra.mxu0 %v537
        %740 = vmatpush.msra.mxu0 %v529
        %741 = vmatpush.msra.mxu0 %v521
        %742 = vmatpush.msra.mxu0 %v513
        %743 = vmatpush.msra.mxu0 %v505
        %744 = vmatpush.msra.mxu0 %v497
        %745 = vmatpush.msra.mxu0 %v489
        %746 = vmatpush.msra.mxu0 %v481
        %747 = vmatpush.msra.mxu0 %v473
        %748 = vmatpush.msra.mxu0 %v465
        %749 = vmatpush.msra.mxu0 %v457
        %750 = vmatpush.msra.mxu0 %v449
        %751 = vmatpush.msra.mxu0 %v441
        %752 = vmatmul.f32.gmra.mxu0 %v438
        %v753 = vpop.f32.mrf.mxu0
        %v754 = vadd.f32 0.0, %v753
        %755 = vdwg.mxu0
        %756 = vmatpush.msra.mxu0 %v689
        %757 = vmatpush.msra.mxu0 %v681
        %758 = vmatpush.msra.mxu0 %v673
        %759 = vmatpush.msra.mxu0 %v665
        %760 = vmatpush.msra.mxu0 %v657
        %761 = vmatpush.msra.mxu0 %v649
        %762 = vmatpush.msra.mxu0 %v641
        %763 = vmatpush.msra.mxu0 %v633
        %764 = vmatpush.msra.mxu0 %v625
        %765 = vmatpush.msra.mxu0 %v617
        %766 = vmatpush.msra.mxu0 %v609
        %767 = vmatpush.msra.mxu0 %v601
        %768 = vmatpush.msra.mxu0 %v593
        %769 = vmatpush.msra.mxu0 %v585
        %770 = vmatpush.msra.mxu0 %v577
        %771 = vmatpush.msra.mxu0 %v569
        %772 = vmatmul.f32.gmra.mxu0 %v439
        %v773 = vpop.f32.mrf.mxu0
        %v774 = vadd.f32 %v754, %v773
        %775 = vdwg.mxu0
        %776 = vmatpush.msra.mxu0 %v562
        %777 = vmatpush.msra.mxu0 %v554
        %778 = vmatpush.msra.mxu0 %v546
        %779 = vmatpush.msra.mxu0 %v538
        %780 = vmatpush.msra.mxu0 %v530
        %781 = vmatpush.msra.mxu0 %v522
        %782 = vmatpush.msra.mxu0 %v514
        %783 = vmatpush.msra.mxu0 %v506
        %784 = vmatpush.msra.mxu0 %v498
        %785 = vmatpush.msra.mxu0 %v490
        %786 = vmatpush.msra.mxu0 %v482
        %787 = vmatpush.msra.mxu0 %v474
        %788 = vmatpush.msra.mxu0 %v466
        %789 = vmatpush.msra.mxu0 %v458
        %790 = vmatpush.msra.mxu0 %v450
        %791 = vmatpush.msra.mxu0 %v442
        %792 = vmatmul.f32.gmra.mxu0 %v438
        %v793 = vpop.f32.mrf.mxu0
        %v794 = vadd.f32 0.0, %v793
        %795 = vdwg.mxu0
        %796 = vmatpush.msra.mxu0 %v690
        %797 = vmatpush.msra.mxu0 %v682
        %798 = vmatpush.msra.mxu0 %v674
        %799 = vmatpush.msra.mxu0 %v666
        %800 = vmatpush.msra.mxu0 %v658
        %801 = vmatpush.msra.mxu0 %v650
        %802 = vmatpush.msra.mxu0 %v642
        %803 = vmatpush.msra.mxu0 %v634
        %804 = vmatpush.msra.mxu0 %v626
        %805 = vmatpush.msra.mxu0 %v618
        %806 = vmatpush.msra.mxu0 %v610
        %807 = vmatpush.msra.mxu0 %v602
        %808 = vmatpush.msra.mxu0 %v594
        %809 = vmatpush.msra.mxu0 %v586
        %810 = vmatpush.msra.mxu0 %v578
        %811 = vmatpush.msra.mxu0 %v570
        %812 = vmatmul.f32.gmra.mxu0 %v439
        %v813 = vpop.f32.mrf.mxu0
        %v814 = vadd.f32 %v794, %v813
        %815 = vdwg.mxu0
        %816 = vmatpush.msra.mxu0 %v563
        %817 = vmatpush.msra.mxu0 %v555
        %818 = vmatpush.msra.mxu0 %v547
        %819 = vmatpush.msra.mxu0 %v539
        %820 = vmatpush.msra.mxu0 %v531
        %821 = vmatpush.msra.mxu0 %v523
        %822 = vmatpush.msra.mxu0 %v515
        %823 = vmatpush.msra.mxu0 %v507
        %824 = vmatpush.msra.mxu0 %v499
        %825 = vmatpush.msra.mxu0 %v491
        %826 = vmatpush.msra.mxu0 %v483
        %827 = vmatpush.msra.mxu0 %v475
        %828 = vmatpush.msra.mxu0 %v467
        %829 = vmatpush.msra.mxu0 %v459
        %830 = vmatpush.msra.mxu0 %v451
        %831 = vmatpush.msra.mxu0 %v443
        %832 = vmatmul.f32.gmra.mxu0 %v438
        %v833 = vpop.f32.mrf.mxu0
        %v834 = vadd.f32 0.0, %v833
        %835 = vdwg.mxu0
        %836 = vmatpush.msra.mxu0 %v691
        %837 = vmatpush.msra.mxu0 %v683
        %838 = vmatpush.msra.mxu0 %v675
        %839 = vmatpush.msra.mxu0 %v667
        %840 = vmatpush.msra.mxu0 %v659
        %841 = vmatpush.msra.mxu0 %v651
        %842 = vmatpush.msra.mxu0 %v643
        %843 = vmatpush.msra.mxu0 %v635
        %844 = vmatpush.msra.mxu0 %v627
        %845 = vmatpush.msra.mxu0 %v619
        %846 = vmatpush.msra.mxu0 %v611
        %847 = vmatpush.msra.mxu0 %v603
        %848 = vmatpush.msra.mxu0 %v595
        %849 = vmatpush.msra.mxu0 %v587
        %850 = vmatpush.msra.mxu0 %v579
        %851 = vmatpush.msra.mxu0 %v571
        %852 = vmatmul.f32.gmra.mxu0 %v439
        %v853 = vpop.f32.mrf.mxu0
        %v854 = vadd.f32 %v834, %v853
        %855 = vdwg.mxu0
        %856 = vmatpush.msra.mxu0 %v564
        %857 = vmatpush.msra.mxu0 %v556
        %858 = vmatpush.msra.mxu0 %v548
        %859 = vmatpush.msra.mxu0 %v540
        %860 = vmatpush.msra.mxu0 %v532
        %861 = vmatpush.msra.mxu0 %v524
        %862 = vmatpush.msra.mxu0 %v516
        %863 = vmatpush.msra.mxu0 %v508
        %864 = vmatpush.msra.mxu0 %v500
        %865 = vmatpush.msra.mxu0 %v492
        %866 = vmatpush.msra.mxu0 %v484
        %867 = vmatpush.msra.mxu0 %v476
        %868 = vmatpush.msra.mxu0 %v468
        %869 = vmatpush.msra.mxu0 %v460
        %870 = vmatpush.msra.mxu0 %v452
        %871 = vmatpush.msra.mxu0 %v444
        %872 = vmatmul.f32.gmra.mxu0 %v438
        %v873 = vpop.f32.mrf.mxu0
        %v874 = vadd.f32 0.0, %v873
        %875 = vdwg.mxu0
        %876 = vmatpush.msra.mxu0 %v692
        %877 = vmatpush.msra.mxu0 %v684
        %878 = vmatpush.msra.mxu0 %v676
        %879 = vmatpush.msra.mxu0 %v668
        %880 = vmatpush.msra.mxu0 %v660
        %881 = vmatpush.msra.mxu0 %v652
        %882 = vmatpush.msra.mxu0 %v644
        %883 = vmatpush.msra.mxu0 %v636
        %884 = vmatpush.msra.mxu0 %v628
        %885 = vmatpush.msra.mxu0 %v620
        %886 = vmatpush.msra.mxu0 %v612
        %887 = vmatpush.msra.mxu0 %v604
        %888 = vmatpush.msra.mxu0 %v596
        %889 = vmatpush.msra.mxu0 %v588
        %890 = vmatpush.msra.mxu0 %v580
        %891 = vmatpush.msra.mxu0 %v572
        %892 = vmatmul.f32.gmra.mxu0 %v439
        %v893 = vpop.f32.mrf.mxu0
        %v894 = vadd.f32 %v874, %v893
        %895 = vdwg.mxu0
        %896 = vmatpush.msra.mxu0 %v565
        %897 = vmatpush.msra.mxu0 %v557
        %898 = vmatpush.msra.mxu0 %v549
        %899 = vmatpush.msra.mxu0 %v541
        %900 = vmatpush.msra.mxu0 %v533
        %901 = vmatpush.msra.mxu0 %v525
        %902 = vmatpush.msra.mxu0 %v517
        %903 = vmatpush.msra.mxu0 %v509
        %904 = vmatpush.msra.mxu0 %v501
        %905 = vmatpush.msra.mxu0 %v493
        %906 = vmatpush.msra.mxu0 %v485
        %907 = vmatpush.msra.mxu0 %v477
        %908 = vmatpush.msra.mxu0 %v469
        %909 = vmatpush.msra.mxu0 %v461
        %910 = vmatpush.msra.mxu0 %v453
        %911 = vmatpush.msra.mxu0 %v445
        %912 = vmatmul.f32.gmra.mxu0 %v438
        %v913 = vpop.f32.mrf.mxu0
        %v914 = vadd.f32 0.0, %v913
        %915 = vdwg.mxu0
        %916 = vmatpush.msra.mxu0 %v693
        %917 = vmatpush.msra.mxu0 %v685
        %918 = vmatpush.msra.mxu0 %v677
        %919 = vmatpush.msra.mxu0 %v669
        %920 = vmatpush.msra.mxu0 %v661
        %921 = vmatpush.msra.mxu0 %v653
        %922 = vmatpush.msra.mxu0 %v645
        %923 = vmatpush.msra.mxu0 %v637
        %924 = vmatpush.msra.mxu0 %v629
        %925 = vmatpush.msra.mxu0 %v621
        %926 = vmatpush.msra.mxu0 %v613
        %927 = vmatpush.msra.mxu0 %v605
        %928 = vmatpush.msra.mxu0 %v597
        %929 = vmatpush.msra.mxu0 %v589
        %930 = vmatpush.msra.mxu0 %v581
        %931 = vmatpush.msra.mxu0 %v573
        %932 = vmatmul.f32.gmra.mxu0 %v439
        %v933 = vpop.f32.mrf.mxu0
        %v934 = vadd.f32 %v914, %v933
        %935 = vdwg.mxu0
        %936 = vmatpush.msra.mxu0 %v566
        %937 = vmatpush.msra.mxu0 %v558
        %938 = vmatpush.msra.mxu0 %v550
        %939 = vmatpush.msra.mxu0 %v542
        %940 = vmatpush.msra.mxu0 %v534
        %941 = vmatpush.msra.mxu0 %v526
        %942 = vmatpush.msra.mxu0 %v518
        %943 = vmatpush.msra.mxu0 %v510
        %944 = vmatpush.msra.mxu0 %v502
        %945 = vmatpush.msra.mxu0 %v494
        %946 = vmatpush.msra.mxu0 %v486
        %947 = vmatpush.msra.mxu0 %v478
        %948 = vmatpush.msra.mxu0 %v470
        %949 = vmatpush.msra.mxu0 %v462
        %950 = vmatpush.msra.mxu0 %v454
        %951 = vmatpush.msra.mxu0 %v446
        %952 = vmatmul.f32.gmra.mxu0 %v438
        %v953 = vpop.f32.mrf.mxu0
        %v954 = vadd.f32 0.0, %v953
        %955 = vdwg.mxu0
        %956 = vmatpush.msra.mxu0 %v694
        %957 = vmatpush.msra.mxu0 %v686
        %958 = vmatpush.msra.mxu0 %v678
        %959 = vmatpush.msra.mxu0 %v670
        %960 = vmatpush.msra.mxu0 %v662
        %961 = vmatpush.msra.mxu0 %v654
        %962 = vmatpush.msra.mxu0 %v646
        %963 = vmatpush.msra.mxu0 %v638
        %964 = vmatpush.msra.mxu0 %v630
        %965 = vmatpush.msra.mxu0 %v622
        %966 = vmatpush.msra.mxu0 %v614
        %967 = vmatpush.msra.mxu0 %v606
        %968 = vmatpush.msra.mxu0 %v598
        %969 = vmatpush.msra.mxu0 %v590
        %970 = vmatpush.msra.mxu0 %v582
        %971 = vmatpush.msra.mxu0 %v574
        %972 = vmatmul.f32.gmra.mxu0 %v439
        %v973 = vpop.f32.mrf.mxu0
        %v974 = vadd.f32 %v954, %v973
        %975 = vdwg.mxu0
        %976 = vmatpush.msra.mxu0 %v567
        %977 = vmatpush.msra.mxu0 %v559
        %978 = vmatpush.msra.mxu0 %v551
        %979 = vmatpush.msra.mxu0 %v543
        %980 = vmatpush.msra.mxu0 %v535
        %981 = vmatpush.msra.mxu0 %v527
        %982 = vmatpush.msra.mxu0 %v519
        %983 = vmatpush.msra.mxu0 %v511
        %984 = vmatpush.msra.mxu0 %v503
        %985 = vmatpush.msra.mxu0 %v495
        %986 = vmatpush.msra.mxu0 %v487
        %987 = vmatpush.msra.mxu0 %v479
        %988 = vmatpush.msra.mxu0 %v471
        %989 = vmatpush.msra.mxu0 %v463
        %990 = vmatpush.msra.mxu0 %v455
        %991 = vmatpush.msra.mxu0 %v447
        %992 = vmatmul.f32.gmra.mxu0 %v438
        %v993 = vpop.f32.mrf.mxu0
        %v994 = vadd.f32 0.0, %v993
        %995 = vdwg.mxu0
        %996 = vmatpush.msra.mxu0 %v695
        %997 = vmatpush.msra.mxu0 %v687
        %998 = vmatpush.msra.mxu0 %v679
        %999 = vmatpush.msra.mxu0 %v671
        %1000 = vmatpush.msra.mxu0 %v663
        %1001 = vmatpush.msra.mxu0 %v655
        %1002 = vmatpush.msra.mxu0 %v647
        %1003 = vmatpush.msra.mxu0 %v639
        %1004 = vmatpush.msra.mxu0 %v631
        %1005 = vmatpush.msra.mxu0 %v623
        %1006 = vmatpush.msra.mxu0 %v615
        %1007 = vmatpush.msra.mxu0 %v607
        %1008 = vmatpush.msra.mxu0 %v599
        %1009 = vmatpush.msra.mxu0 %v591
        %1010 = vmatpush.msra.mxu0 %v583
        %1011 = vmatpush.msra.mxu0 %v575
        %1012 = vmatmul.f32.gmra.mxu0 %v439
        %v1013 = vpop.f32.mrf.mxu0
        %v1014 = vadd.f32 %v994, %v1013
        %1015 = vdwg.mxu0
        %1016 = vst [vmem:[%s263] sm:$0xff] %v734
        %1017 = vst [vmem:[%s263 + $0x8] sm:$0xff] %v774
        %1018 = vst [vmem:[%s263 + $0x10] sm:$0xff] %v814
        %1019 = vst [vmem:[%s263 + $0x18] sm:$0xff] %v854
        %1020 = vst [vmem:[%s263 + $0x20] sm:$0xff] %v894
        %1021 = vst [vmem:[%s263 + $0x28] sm:$0xff] %v934
        %1022 = vst [vmem:[%s263 + $0x30] sm:$0xff] %v974
        %1023 = vst [vmem:[%s263 + $0x38] sm:$0xff] %v1014
        %s1024 = sand.u32 %s120, 1
        %s1025 = scalar_lea.sflag [#allocation5], %s1024
        %s1026 = sand.u32 %s120, 1
        %s1027 = smul.addr %s1026, 64
        %s1028 = scalar_lea.vmem [#allocation11], %s1027
        // Predicated region
        $region53: #{tpu_custom_call.1} parent=35 // pred_check
          %p1029 = pneg %p130
        $region54: #{tpu_custom_call.1} parent=35 // pred_check_branch
          %1031 = sbr.rel (%p1029) target = $region56
        $region55: #{tpu_custom_call.1} parent=35 // pred_region
          %1033 = vsyncadd %s1025, 0
          %s1034 = smul.addr %s23, 8
          %s1035 = smul.addr %s1034, 8
          %s1036 = scalar_lea.hbm %s4, %s1035
          %s1038 = sshll.u32 %s1028, 4
          %s1039 = int_to_ptr.vmem [resolvable:$true] %s1038
          %s1040 = sshll.u32 %s1036, 4
          %s1041 = int_to_ptr.hbm [resolvable:$true] %s1040
          %1043 = dma.vmem_to_hbm [thread:$0]  %s1039, 1024, %s1041, %s1025
        $region56: #{tpu_custom_call.1} parent=35 // pred_fallthru
          _
      $region36: #{tpu_custom_call.1} parent=5 // pred_fallthru
        _
      %p1044 = scmp.le.s32.totalorder 2, %s18
      // Predicated region
      $region57: #{tpu_custom_call.1} parent=5 // pred_check
        %p1045 = pneg %p1044
      $region58: #{tpu_custom_call.1} parent=5 // pred_check_branch
        %1047 = sbr.rel (%p1045) target = $region60
      $region59: #{tpu_custom_call.1} parent=5 // pred_region
        %s1048 = ssub.s32 %s18, 2
        // Predicated region
        $region61: #{tpu_custom_call.1} parent=59 // pred_check
          %p1049 = pneg %p136
        $region62: #{tpu_custom_call.1} parent=59 // pred_check_branch
          %1051 = sbr.rel (%p1049) target = $region64
        $region63: #{tpu_custom_call.1} parent=59 // pred_region
          %s1052 = sand.u32 %s121, 1
          %s1053 = scalar_lea.sflag [#allocation5], %s1052
          %s1054 = sand.u32 %s121, 1
          %s1055 = smul.addr %s1054, 64
          %s1056 = scalar_lea.vmem [#allocation11], %s1055
          %1058 = dma.done %s1053, 1024
        $region64: #{tpu_custom_call.1} parent=59 // pred_fallthru
          _
      $region60: #{tpu_custom_call.1} parent=5 // pred_fallthru
        _
    $region6: #{tpu_custom_call.1} parent=1 // loop_footer
      %s22 = sadd.s32 1, %s18
    $region7: #{tpu_custom_call.1} parent=1 // loop_footer_branch
      %17 = sbr.rel target = $region3
    $region8: #{tpu_custom_call.1} parent=1 // loop_exit
      _
    %1059 = vsyncpa [#allocation4], 1
    %s1060 = scalar_lea.sflag [#allocation4], 1
    %1061 = vsyncpa %s1060, 1
    %1062 = vsyncpa [#allocation7], 1
    %1063 = vsyncpa [#allocation10], 1
    %1064 = vsyncpa [#allocation5], 1
    %s1065 = scalar_lea.sflag [#allocation5], 1
    %1066 = vsyncpa %s1065, 1

// kernel: tpu_custom_call.1
$region0: #{tpu_custom_call.1}
  #allocation0 [shape = 'u32[]', space=smem, size = 0x4, offset = 0x4, fixed_abs, tag = 'smem constant byte address 0x4 - core index']
  #allocation1 [shape = 'u32[72,128]{1,0:T(1,128)}', space=vmem, size = 0x9000, scoped, tag = 'internal scratch']
  #allocation2 [shape = 'f32[8,256]{1,0:T(8,128)}', space=vmem, size = 0x2000, scoped, tag = 'scratch operand']
  %s0 = inlined_call_operand.hbm [shape: f32[2,8,256], index: 0, kind: input, shape index: {}]
  %s1 = inlined_call_operand.hbm [shape: f32[8,72], index: 1, kind: input, shape index: {}]
  %s2 = inlined_call_operand.hbm [shape: f32[9,1,256], index: 2, kind: input, shape index: {}]
  %s3 = inlined_call_operand.hbm [shape: f32[256,1024], index: 3, kind: input, shape index: {}]
  %s4 = inlined_call_operand.hbm [shape: f32[2,8,1024], index: 4, kind: output, shape index: {}]
  %s5 = sld [smem:[#allocation0]]
  $region65: #{tpu_custom_call.1} parent=0
    _
  %s7 = ssub.s32 1, %s5
  %s8 = scalar_select 0, %s7, %s5
  $region1: #{tpu_custom_call.1} parent=0
    #allocation3 [shape = 'u8[16384]{0}', space=vmem, size = 0x4000, scoped, tag = 'input window, operand 0']
    #allocation4 [shape = 's32[2]{0}', space=sflag, size = 0x8, scoped, tag = 'scoped memory for tpu_custom_call.1']
    #allocation5 [shape = 's32[2]{0}', space=sflag, size = 0x8, scoped, tag = 'scoped memory for tpu_custom_call.1']
    #allocation6 [shape = 'u8[4096]{0}', space=vmem, size = 0x1000, scoped, tag = 'input window, operand 1, single buffered']
    #allocation7 [shape = 's32[1]{0}', space=sflag, size = 0x4, scoped, tag = 'scoped memory for tpu_custom_call.1']
    #allocation8 [shape = 'u8[9216]{0}', space=vmem, size = 0x2400, scoped, tag = 'input window, operand 2, single buffered']
    #allocation9 [shape = 'u8[1048576]{0}', space=vmem, size = 0x100000, scoped, tag = 'input window, operand 3, single buffered']
    #allocation10 [shape = 's32[1]{0}', space=sflag, size = 0x4, scoped, tag = 'scoped memory for tpu_custom_call.1']
    #allocation11 [shape = 'u8[65536]{0}', space=vmem, size = 0x10000, scoped, tag = 'output window, operand 0']
    %9 = vsyncpa [#allocation4], 0
    %s10 = scalar_lea.sflag [#allocation4], 1
    %11 = vsyncpa %s10, 0
    %12 = vsyncpa [#allocation7], 0
    %13 = vsyncpa [#allocation10], 0
    %14 = vsyncpa [#allocation5], 0
    %s15 = scalar_lea.sflag [#allocation5], 1
    %16 = vsyncpa %s15, 0
    loop: start=0, step=1, limit=4
    $region2: #{tpu_custom_call.1} parent=1 // loop_pre_header
      _
    $region3: #{tpu_custom_call.1} parent=1 // loop_header
      %s18 = sphi 0, %s22
      %p19 = scmp.ge.s32.totalorder %s18, 4
      %s28 = sphi 0, %s30
      %s31 = sphi 0, %s28
      %s32 = sphi 0, %s31
      %s48 = sphi 0, %s32
      %s52 = sphi 0, %s52
      %s54 = sphi 0, %s52
      %s55 = sphi 0, %s54
      %s69 = sphi 0, %s55
      %s73 = sphi 0, %s73
      %s75 = sphi 0, %s73
      %s76 = sphi 0, %s75
      %s90 = sphi 0, %s76
      %s94 = sphi 0, %s94
      %s96 = sphi 0, %s94
      %s97 = sphi 0, %s96
      %s111 = sphi 0, %s97
      %s117 = sphi 0, %s119
      %s120 = sphi 0, %s117
      %s121 = sphi 0, %s120
      %s137 = sphi 0, %s121
    $region4: #{tpu_custom_call.1} parent=1 // loop_header_branch
      %21 = sbr.rel (%p19) target = $region8
    $region5: #{tpu_custom_call.1} parent=1 // loop_body
      %s23 = ssub.s32 %s18, 1
      %s24 = ssub.s32 %s18, 2
      %s25 = sadd.s32 %s18, 1
      %s26 = ssub.s32 %s18, %s25
      %p27 = scmp.eq.s32.totalorder %s26, 0
      %s29 = sadd.s32 %s28, 1
      %s30 = scalar_select %p27, %s28, %s29
      %p33 = pneg %p27
      %p34 = scmp.eq.s32.totalorder %s18, 1
      %p35 = por %p33, %p34
      %p36 = scmp.ne.s32.totalorder %s28, %s31
      %p37 = scmp.eq.s32.totalorder %s18, 0
      %p38 = por %p36, %p37
      %p39 = scmp.ne.s32.totalorder %s28, %s31
      %p40 = scmp.eq.s32.totalorder %s23, 1
      %p41 = por %p39, %p40
      %p42 = scmp.ne.s32.totalorder %s31, %s32
      %p43 = scmp.eq.s32.totalorder %s23, 0
      %p44 = por %p42, %p43
      %p45 = scmp.ne.s32.totalorder %s31, %s32
      %p46 = scmp.eq.s32.totalorder %s24, 1
      %p47 = por %p45, %p46
      %p49 = scmp.ne.s32.totalorder %s32, %s48
      %p50 = scmp.eq.s32.totalorder %s24, 0
      %p51 = por %p49, %p50
      %s53 = sadd.s32 %s52, 1
      %p56 = scmp.eq.s32.totalorder %s18, 1
      %p57 = scmp.ne.s32.totalorder %s52, %s54
      %p58 = scmp.eq.s32.totalorder %s18, 0
      %p59 = por %p57, %p58
      %p60 = scmp.ne.s32.totalorder %s52, %s54
      %p61 = scmp.eq.s32.totalorder %s23, 1
      %p62 = por %p60, %p61
      %p63 = scmp.ne.s32.totalorder %s54, %s55
      %p64 = scmp.eq.s32.totalorder %s23, 0
      %p65 = por %p63, %p64
      %p66 = scmp.ne.s32.totalorder %s54, %s55
      %p67 = scmp.eq.s32.totalorder %s24, 1
      %p68 = por %p66, %p67
      %p70 = scmp.ne.s32.totalorder %s55, %s69
      %p71 = scmp.eq.s32.totalorder %s24, 0
      %p72 = por %p70, %p71
      %s74 = sadd.s32 %s73, 1
      %p77 = scmp.eq.s32.totalorder %s18, 1
      %p78 = scmp.ne.s32.totalorder %s73, %s75
      %p79 = scmp.eq.s32.totalorder %s18, 0
      %p80 = por %p78, %p79
      %p81 = scmp.ne.s32.totalorder %s73, %s75
      %p82 = scmp.eq.s32.totalorder %s23, 1
      %p83 = por %p81, %p82
      %p84 = scmp.ne.s32.totalorder %s75, %s76
      %p85 = scmp.eq.s32.totalorder %s23, 0
      %p86 = por %p84, %p85
      %p87 = scmp.ne.s32.totalorder %s75, %s76
      %p88 = scmp.eq.s32.totalorder %s24, 1
      %p89 = por %p87, %p88
      %p91 = scmp.ne.s32.totalorder %s76, %s90
      %p92 = scmp.eq.s32.totalorder %s24, 0
      %p93 = por %p91, %p92
      %s95 = sadd.s32 %s94, 1
      %p98 = scmp.eq.s32.totalorder %s18, 1
      %p99 = scmp.ne.s32.totalorder %s94, %s96
      %p100 = scmp.eq.s32.totalorder %s18, 0
      %p101 = por %p99, %p100
      %p102 = scmp.ne.s32.totalorder %s94, %s96
      %p103 = scmp.eq.s32.totalorder %s23, 1
      %p104 = por %p102, %p103
      %p105 = scmp.ne.s32.totalorder %s96, %s97
      %p106 = scmp.eq.s32.totalorder %s23, 0
      %p107 = por %p105, %p106
      %p108 = scmp.ne.s32.totalorder %s96, %s97
      %p109 = scmp.eq.s32.totalorder %s24, 1
      %p110 = por %p108, %p109
      %p112 = scmp.ne.s32.totalorder %s97, %s111
      %p113 = scmp.eq.s32.totalorder %s24, 0
      %p114 = por %p112, %p113
      %s115 = ssub.s32 %s18, %s25
      %p116 = scmp.eq.s32.totalorder %s115, 0
      %s118 = sadd.s32 %s117, 1
      %s119 = scalar_select %p116, %s117, %s118
      %p122 = pneg %p116
      %p123 = scmp.eq.s32.totalorder %s18, 1
      %p124 = por %p122, %p123
      %p125 = scmp.ne.s32.totalorder %s117, %s120
      %p126 = scmp.eq.s32.totalorder %s18, 0
      %p127 = por %p125, %p126
      %p128 = scmp.ne.s32.totalorder %s117, %s120
      %p129 = scmp.eq.s32.totalorder %s23, 1
      %p130 = por %p128, %p129
      %p131 = scmp.ne.s32.totalorder %s120, %s121
      %p132 = scmp.eq.s32.totalorder %s23, 0
      %p133 = por %p131, %p132
      %p134 = scmp.ne.s32.totalorder %s120, %s121
      %p135 = scmp.eq.s32.totalorder %s24, 1
      %p136 = por %p134, %p135
      %p138 = scmp.ne.s32.totalorder %s121, %s137
      %p139 = scmp.eq.s32.totalorder %s24, 0
      %p140 = por %p138, %p139
      %p141 = scmp.le.s32.totalorder 1, %s18
      %p142 = scmp.lt.s32.totalorder %s18, 3
      %p143 = pnand %p141, %p142
      %p144 = pneg %p143
      // Predicated region
      $region9: #{tpu_custom_call.1} parent=5 // pred_check
        _
      $region10: #{tpu_custom_call.1} parent=5 // pred_check_branch
        %146 = sbr.rel (%p143) target = $region12
      $region11: #{tpu_custom_call.1} parent=5 // pred_region
        %s147 = ssub.s32 %s18, 1
        // Predicated region
        $region13: #{tpu_custom_call.1} parent=11 // pred_check
          %p148 = pneg %p65
        $region14: #{tpu_custom_call.1} parent=11 // pred_check_branch
          %150 = sbr.rel (%p148) target = $region16
        $region15: #{tpu_custom_call.1} parent=11 // pred_region
          %152 = vsyncadd [#allocation7], 0
          %s154 = sshll.u32 %s1, 4
          %s155 = int_to_ptr.hbm [resolvable:$true] %s154
          %s156 = sshll.u32 [#allocation6], 4
          %s157 = int_to_ptr.vmem [resolvable:$true] %s156
          %159 = dma.hbm_to_vmem [thread:$0]  %s155, 128, %s157, [#allocation7]
        $region16: #{tpu_custom_call.1} parent=11 // pred_fallthru
          _
        // Predicated region
        $region17: #{tpu_custom_call.1} parent=11 // pred_check
          %p160 = pneg %p86
        $region18: #{tpu_custom_call.1} parent=11 // pred_check_branch
          %162 = sbr.rel (%p160) target = $region20
        $region19: #{tpu_custom_call.1} parent=11 // pred_region
          %164 = vsyncadd [#allocation7], 0
          %s165 = sshll.u32 %s2, 4
          %s166 = int_to_ptr.hbm [resolvable:$true] %s165
          %s167 = sshll.u32 [#allocation8], 4
          %s168 = int_to_ptr.vmem [resolvable:$true] %s167
          %173 = dma.hbm_to_vmem [thread:$0]  %s166, 288, %s168, [#allocation7], 32, 32, 2
        $region20: #{tpu_custom_call.1} parent=11 // pred_fallthru
          _
        // Predicated region
        $region21: #{tpu_custom_call.1} parent=11 // pred_check
          %p174 = pneg %p107
        $region22: #{tpu_custom_call.1} parent=11 // pred_check_branch
          %176 = sbr.rel (%p174) target = $region24
        $region23: #{tpu_custom_call.1} parent=11 // pred_region
          %178 = vsyncadd [#allocation10], 0
          %s179 = sshll.u32 %s3, 4
          %s180 = int_to_ptr.hbm [resolvable:$true] %s179
          %s181 = sshll.u32 [#allocation9], 4
          %s182 = int_to_ptr.vmem [resolvable:$true] %s181
          %187 = dma.hbm_to_vmem [thread:$0]  %s180, 32768, %s182, [#allocation10], 1024, 1024, 64
        $region24: #{tpu_custom_call.1} parent=11 // pred_fallthru
          _
      $region12: #{tpu_custom_call.1} parent=5 // pred_fallthru
        _
      %p188 = scmp.lt.s32.totalorder %s18, 2
      // Predicated region
      $region25: #{tpu_custom_call.1} parent=5 // pred_check
        %p189 = pneg %p188
      $region26: #{tpu_custom_call.1} parent=5 // pred_check_branch
        %191 = sbr.rel (%p189) target = $region28
      $region27: #{tpu_custom_call.1} parent=5 // pred_region
        // Predicated region
        $region29: #{tpu_custom_call.1} parent=27 // pred_check
          %p192 = pneg %p38
        $region30: #{tpu_custom_call.1} parent=27 // pred_check_branch
          %194 = sbr.rel (%p192) target = $region32
        $region31: #{tpu_custom_call.1} parent=27 // pred_region
          %s195 = sand.u32 %s28, 1
          %s196 = scalar_lea.sflag [#allocation4], %s195
          %s197 = sand.u32 %s28, 1
          %s198 = smul.addr %s197, 16
          %s199 = scalar_lea.vmem [#allocation3], %s198
          %201 = vsyncadd %s196, 0
          %s202 = smul.addr %s18, 2
          %s203 = smul.addr %s202, 8
          %s204 = scalar_lea.hbm %s0, %s203
          %s206 = sshll.u32 %s204, 4
          %s207 = int_to_ptr.hbm [resolvable:$true] %s206
          %s208 = sshll.u32 %s199, 4
          %s209 = int_to_ptr.vmem [resolvable:$true] %s208
          %211 = dma.hbm_to_vmem [thread:$0]  %s207, 256, %s209, %s196
        $region32: #{tpu_custom_call.1} parent=27 // pred_fallthru
          _
      $region28: #{tpu_custom_call.1} parent=5 // pred_fallthru
        _
      %p212 = scmp.le.s32.totalorder 1, %s18
      %p213 = scmp.lt.s32.totalorder %s18, 3
      %p214 = pnand %p212, %p213
      %p215 = pneg %p214
      // Predicated region
      $region33: #{tpu_custom_call.1} parent=5 // pred_check
        _
      $region34: #{tpu_custom_call.1} parent=5 // pred_check_branch
        %217 = sbr.rel (%p214) target = $region36
      $region35: #{tpu_custom_call.1} parent=5 // pred_region
        %s218 = ssub.s32 %s18, 1
        %s219 = sand.u32 %s31, 1
        %s220 = scalar_lea.sflag [#allocation4], %s219
        %s221 = sand.u32 %s31, 1
        %s222 = smul.addr %s221, 16
        %s223 = scalar_lea.vmem [#allocation3], %s222
        // Predicated region
        $region37: #{tpu_custom_call.1} parent=35 // pred_check
          %p224 = pneg %p44
        $region38: #{tpu_custom_call.1} parent=35 // pred_check_branch
          %226 = sbr.rel (%p224) target = $region40
        $region39: #{tpu_custom_call.1} parent=35 // pred_region
          %228 = dma.done %s220, 256
        $region40: #{tpu_custom_call.1} parent=35 // pred_fallthru
          _
        // Predicated region
        $region41: #{tpu_custom_call.1} parent=35 // pred_check
          %p229 = pneg %p65
        $region42: #{tpu_custom_call.1} parent=35 // pred_check_branch
          %231 = sbr.rel (%p229) target = $region44
        $region43: #{tpu_custom_call.1} parent=35 // pred_region
          %233 = dma.done [#allocation7], 128
        $region44: #{tpu_custom_call.1} parent=35 // pred_fallthru
          _
        // Predicated region
        $region45: #{tpu_custom_call.1} parent=35 // pred_check
          %p234 = pneg %p86
        $region46: #{tpu_custom_call.1} parent=35 // pred_check_branch
          %236 = sbr.rel (%p234) target = $region48
        $region47: #{tpu_custom_call.1} parent=35 // pred_region
          %238 = dma.done [#allocation7], 288
        $region48: #{tpu_custom_call.1} parent=35 // pred_fallthru
          _
        // Predicated region
        $region49: #{tpu_custom_call.1} parent=35 // pred_check
          %p239 = pneg %p107
        $region50: #{tpu_custom_call.1} parent=35 // pred_check_branch
          %241 = sbr.rel (%p239) target = $region52
        $region51: #{tpu_custom_call.1} parent=35 // pred_region
          %243 = dma.done [#allocation10], 32768
        $region52: #{tpu_custom_call.1} parent=35 // pred_fallthru
          _
        %s244 = sand.u32 %s31, 1
        %s245 = scalar_lea.sflag [#allocation4], %s244
        %s246 = sand.u32 %s31, 1
        %s247 = smul.addr %s246, 16
        %s248 = scalar_lea.vmem [#allocation3], %s247
        %p249 = pneg %p44
        %p250 = pneg %p41
        %p251 = pneg %p65
        %p252 = pneg %p62
        %p253 = pneg %p86
        %p254 = pneg %p83
        %p255 = pneg %p107
        %p256 = pneg %p104
        %p257 = pneg %p133
        %p258 = pneg %p130
        %s259 = sand.u32 %s120, 1
        %s260 = scalar_lea.sflag [#allocation5], %s259
        %s261 = sand.u32 %s120, 1
        %s262 = smul.addr %s261, 64
        %s263 = scalar_lea.vmem [#allocation11], %s262
        %v264 = vld [vmem:[#allocation6] sm:$0xff]
        %v265 = vld [vmem:[#allocation8] sm:$0x3]
        %v266 = vld [vmem:[#allocation8 + $0x2] sm:$0x3]
        %v267 = vld [vmem:[#allocation8 + $0x4] sm:$0x3]
        %v268 = vld [vmem:[#allocation8 + $0x6] sm:$0x3]
        %v269 = vld [vmem:[#allocation8 + $0xa] sm:$0x3]
        %v270 = vld [vmem:[#allocation8 + $0xc] sm:$0x3]
        %v271 = vld [vmem:[#allocation8 + $0xe] sm:$0x3]
        %v272 = vld [vmem:[#allocation8 + $0x10] sm:$0x3]
        %v273 = vld [vmem:[%s223] sm:$0xff]
        %v274 = vld [vmem:[%s223 + $0x8] sm:$0xff]
        %275 = vrot.lane.b32.xlu0 %v273, 17
        %v276 = vpop.permute.xlu0 %275
        %277 = vrot.lane.b32.xlu0 %v274, 17
        %v278 = vpop.permute.xlu0 %277
        %v279 = vlaneseq
        %v280 = vand.u32 %v279, 127
        %vm281 = vcmp.lt.s32.totalorder %v280, 17
        %v282 = vsel %vm281, %v276, %v278
        %v283 = vsel %vm281, %v278, %v276
        %v285 = vperm.slane %v265, 0
        %v286 = vperm.slane %v265, 1
        %v289 = vmul.f32 %v283, %v285
        %v290 = vmul.f32 %v282, %v286
        %291 = vrot.lane.b32.xlu0 %v273, 16
        %v292 = vpop.permute.xlu0 %291
        %293 = vrot.lane.b32.xlu0 %v274, 16
        %v294 = vpop.permute.xlu0 %293
        %vm295 = vcmp.lt.s32.totalorder %v280, 16
        %v296 = vsel %vm295, %v292, %v294
        %v297 = vsel %vm295, %v294, %v292
        %v299 = vperm.slane %v266, 0
        %v300 = vperm.slane %v266, 1
        %v303 = vmul.f32 %v297, %v299
        %v304 = vmul.f32 %v296, %v300
        %305 = vrot.lane.b32.xlu0 %v273, 15
        %v306 = vpop.permute.xlu0 %305
        %307 = vrot.lane.b32.xlu0 %v274, 15
        %v308 = vpop.permute.xlu0 %307
        %vm309 = vcmp.lt.s32.totalorder %v280, 15
        %v310 = vsel %vm309, %v306, %v308
        %v311 = vsel %vm309, %v308, %v306
        %v313 = vperm.slane %v267, 0
        %v314 = vperm.slane %v267, 1
        %v317 = vmul.f32 %v311, %v313
        %v318 = vmul.f32 %v310, %v314
        %319 = vrot.lane.b32.xlu0 %v273, 1
        %v320 = vpop.permute.xlu0 %319
        %321 = vrot.lane.b32.xlu0 %v274, 1
        %v322 = vpop.permute.xlu0 %321
        %vm323 = vcmp.lt.s32.totalorder %v280, 1
        %v324 = vsel %vm323, %v320, %v322
        %v325 = vsel %vm323, %v322, %v320
        %v327 = vperm.slane %v268, 0
        %v328 = vperm.slane %v268, 1
        %v331 = vmul.f32 %v325, %v327
        %v332 = vmul.f32 %v324, %v328
        %333 = vrot.lane.b32.xlu0 %v273, 127
        %v334 = vpop.permute.xlu0 %333
        %335 = vrot.lane.b32.xlu0 %v274, 127
        %v336 = vpop.permute.xlu0 %335
        %vm337 = vcmp.lt.s32.totalorder %v280, 127
        %v338 = vsel %vm337, %v334, %v336
        %v339 = vsel %vm337, %v336, %v334
        %v341 = vperm.slane %v269, 0
        %v342 = vperm.slane %v269, 1
        %v345 = vmul.f32 %v338, %v341
        %v346 = vmul.f32 %v339, %v342
        %347 = vrot.lane.b32.xlu0 %v273, 113
        %v348 = vpop.permute.xlu0 %347
        %349 = vrot.lane.b32.xlu0 %v274, 113
        %v350 = vpop.permute.xlu0 %349
        %vm351 = vcmp.lt.s32.totalorder %v280, 113
        %v352 = vsel %vm351, %v348, %v350
        %v353 = vsel %vm351, %v350, %v348
        %v355 = vperm.slane %v270, 0
        %v356 = vperm.slane %v270, 1
        %v359 = vmul.f32 %v352, %v355
        %v360 = vmul.f32 %v353, %v356
        %361 = vrot.lane.b32.xlu0 %v273, 112
        %v362 = vpop.permute.xlu0 %361
        %363 = vrot.lane.b32.xlu0 %v274, 112
        %v364 = vpop.permute.xlu0 %363
        %vm365 = vcmp.lt.s32.totalorder %v280, 112
        %v366 = vsel %vm365, %v362, %v364
        %v367 = vsel %vm365, %v364, %v362
        %v369 = vperm.slane %v271, 0
        %v370 = vperm.slane %v271, 1
        %v373 = vmul.f32 %v366, %v369
        %v374 = vmul.f32 %v367, %v370
        %375 = vrot.lane.b32.xlu0 %v273, 111
        %v376 = vpop.permute.xlu0 %375
        %377 = vrot.lane.b32.xlu0 %v274, 111
        %v378 = vpop.permute.xlu0 %377
        %vm379 = vcmp.lt.s32.totalorder %v280, 111
        %v380 = vsel %vm379, %v376, %v378
        %v381 = vsel %vm379, %v378, %v376
        %v383 = vperm.slane %v272, 0
        %v384 = vperm.slane %v272, 1
        %v387 = vmul.f32 %v380, %v383
        %v388 = vmul.f32 %v381, %v384
        %vm389 = vcmask 588800
        %v391 = vsel %vm389, %v264, 0
        %393 = vmatpush.msra.mxu0 0.0
        %394 = vmatpush.msra.mxu0 0.0
        %395 = vmatpush.msra.mxu0 0.0
        %396 = vmatpush.msra.mxu0 0.0
        %397 = vmatpush.msra.mxu0 0.0
        %398 = vmatpush.msra.mxu0 0.0
        %399 = vmatpush.msra.mxu0 0.0
        %400 = vmatpush.msra.mxu0 %v387
        %401 = vmatpush.msra.mxu0 %v373
        %402 = vmatpush.msra.mxu0 %v359
        %403 = vmatpush.msra.mxu0 %v345
        %404 = vmatpush.msra.mxu0 %v273
        %405 = vmatpush.msra.mxu0 %v331
        %406 = vmatpush.msra.mxu0 %v317
        %407 = vmatpush.msra.mxu0 %v303
        %408 = vmatpush.msra.mxu0 %v289
        %409 = vmatmul.f32.gmra.mxu0 %v391
        %v410 = vpop.f32.mrf.mxu0
        %v411 = vadd.f32 0.0, %v410
        %412 = vdwg.mxu0
        %413 = vmatpush.msra.mxu0 0.0
        %414 = vmatpush.msra.mxu0 0.0
        %415 = vmatpush.msra.mxu0 0.0
        %416 = vmatpush.msra.mxu0 0.0
        %417 = vmatpush.msra.mxu0 0.0
        %418 = vmatpush.msra.mxu0 0.0
        %419 = vmatpush.msra.mxu0 0.0
        %420 = vmatpush.msra.mxu0 %v388
        %421 = vmatpush.msra.mxu0 %v374
        %422 = vmatpush.msra.mxu0 %v360
        %423 = vmatpush.msra.mxu0 %v346
        %424 = vmatpush.msra.mxu0 %v274
        %425 = vmatpush.msra.mxu0 %v332
        %426 = vmatpush.msra.mxu0 %v318
        %427 = vmatpush.msra.mxu0 %v304
        %428 = vmatpush.msra.mxu0 %v290
        %429 = vmatmul.f32.gmra.mxu0 %v391
        %v430 = vpop.f32.mrf.mxu0
        %v431 = vadd.f32 0.0, %v430
        %432 = vdwg.mxu0
        %s433 = smul.u32 0, 2
        %s434 = smul.addr %s433, 8
        %s435 = scalar_lea.vmem [#allocation2], %s434
        %436 = vst [vmem:[%s435] sm:$0xff] %v411
        %437 = vst [vmem:[%s435 + $0x8] sm:$0xff] %v431
        %v438 = vld [vmem:[#allocation2] sm:$0xff]
        %v439 = vld [vmem:[#allocation2 + $0x8] sm:$0xff]
        %v440 = vld [vmem:[#allocation9] sm:$0xff]
        %v441 = vld [vmem:[#allocation9 + $0x8] sm:$0xff]
        %v442 = vld [vmem:[#allocation9 + $0x10] sm:$0xff]
        %v443 = vld [vmem:[#allocation9 + $0x18] sm:$0xff]
        %v444 = vld [vmem:[#allocation9 + $0x20] sm:$0xff]
        %v445 = vld [vmem:[#allocation9 + $0x28] sm:$0xff]
        %v446 = vld [vmem:[#allocation9 + $0x30] sm:$0xff]
        %v447 = vld [vmem:[#allocation9 + $0x38] sm:$0xff]
        %v448 = vld [vmem:[#allocation9 + $0x40] sm:$0xff]
        %v449 = vld [vmem:[#allocation9 + $0x48] sm:$0xff]
        %v450 = vld [vmem:[#allocation9 + $0x50] sm:$0xff]
        %v451 = vld [vmem:[#allocation9 + $0x58] sm:$0xff]
        %v452 = vld [vmem:[#allocation9 + $0x60] sm:$0xff]
        %v453 = vld [vmem:[#allocation9 + $0x68] sm:$0xff]
        %v454 = vld [vmem:[#allocation9 + $0x70] sm:$0xff]
        %v455 = vld [vmem:[#allocation9 + $0x78] sm:$0xff]
        %v456 = vld [vmem:[#allocation9 + $0x80] sm:$0xff]
        %v457 = vld [vmem:[#allocation9 + $0x88] sm:$0xff]
        %v458 = vld [vmem:[#allocation9 + $0x90] sm:$0xff]
        %v459 = vld [vmem:[#allocation9 + $0x98] sm:$0xff]
        %v460 = vld [vmem:[#allocation9 + $0xa0] sm:$0xff]
        %v461 = vld [vmem:[#allocation9 + $0xa8] sm:$0xff]
        %v462 = vld [vmem:[#allocation9 + $0xb0] sm:$0xff]
        %v463 = vld [vmem:[#allocation9 + $0xb8] sm:$0xff]
        %v464 = vld [vmem:[#allocation9 + $0xc0] sm:$0xff]
        %v465 = vld [vmem:[#allocation9 + $0xc8] sm:$0xff]
        %v466 = vld [vmem:[#allocation9 + $0xd0] sm:$0xff]
        %v467 = vld [vmem:[#allocation9 + $0xd8] sm:$0xff]
        %v468 = vld [vmem:[#allocation9 + $0xe0] sm:$0xff]
        %v469 = vld [vmem:[#allocation9 + $0xe8] sm:$0xff]
        %v470 = vld [vmem:[#allocation9 + $0xf0] sm:$0xff]
        %v471 = vld [vmem:[#allocation9 + $0xf8] sm:$0xff]
        %v472 = vld [vmem:[#allocation9 + $0x100] sm:$0xff]
        %v473 = vld [vmem:[#allocation9 + $0x108] sm:$0xff]
        %v474 = vld [vmem:[#allocation9 + $0x110] sm:$0xff]
        %v475 = vld [vmem:[#allocation9 + $0x118] sm:$0xff]
        %v476 = vld [vmem:[#allocation9 + $0x120] sm:$0xff]
        %v477 = vld [vmem:[#allocation9 + $0x128] sm:$0xff]
        %v478 = vld [vmem:[#allocation9 + $0x130] sm:$0xff]
        %v479 = vld [vmem:[#allocation9 + $0x138] sm:$0xff]
        %v480 = vld [vmem:[#allocation9 + $0x140] sm:$0xff]
        %v481 = vld [vmem:[#allocation9 + $0x148] sm:$0xff]
        %v482 = vld [vmem:[#allocation9 + $0x150] sm:$0xff]
        %v483 = vld [vmem:[#allocation9 + $0x158] sm:$0xff]
        %v484 = vld [vmem:[#allocation9 + $0x160] sm:$0xff]
        %v485 = vld [vmem:[#allocation9 + $0x168] sm:$0xff]
        %v486 = vld [vmem:[#allocation9 + $0x170] sm:$0xff]
        %v487 = vld [vmem:[#allocation9 + $0x178] sm:$0xff]
        %v488 = vld [vmem:[#allocation9 + $0x180] sm:$0xff]
        %v489 = vld [vmem:[#allocation9 + $0x188] sm:$0xff]
        %v490 = vld [vmem:[#allocation9 + $0x190] sm:$0xff]
        %v491 = vld [vmem:[#allocation9 + $0x198] sm:$0xff]
        %v492 = vld [vmem:[#allocation9 + $0x1a0] sm:$0xff]
        %v493 = vld [vmem:[#allocation9 + $0x1a8] sm:$0xff]
        %v494 = vld [vmem:[#allocation9 + $0x1b0] sm:$0xff]
        %v495 = vld [vmem:[#allocation9 + $0x1b8] sm:$0xff]
        %v496 = vld [vmem:[#allocation9 + $0x1c0] sm:$0xff]
        %v497 = vld [vmem:[#allocation9 + $0x1c8] sm:$0xff]
        %v498 = vld [vmem:[#allocation9 + $0x1d0] sm:$0xff]
        %v499 = vld [vmem:[#allocation9 + $0x1d8] sm:$0xff]
        %v500 = vld [vmem:[#allocation9 + $0x1e0] sm:$0xff]
        %v501 = vld [vmem:[#allocation9 + $0x1e8] sm:$0xff]
        %v502 = vld [vmem:[#allocation9 + $0x1f0] sm:$0xff]
        %v503 = vld [vmem:[#allocation9 + $0x1f8] sm:$0xff]
        %v504 = vld [vmem:[#allocation9 + $0x200] sm:$0xff]
        %v505 = vld [vmem:[#allocation9 + $0x208] sm:$0xff]
        %v506 = vld [vmem:[#allocation9 + $0x210] sm:$0xff]
        %v507 = vld [vmem:[#allocation9 + $0x218] sm:$0xff]
        %v508 = vld [vmem:[#allocation9 + $0x220] sm:$0xff]
        %v509 = vld [vmem:[#allocation9 + $0x228] sm:$0xff]
        %v510 = vld [vmem:[#allocation9 + $0x230] sm:$0xff]
        %v511 = vld [vmem:[#allocation9 + $0x238] sm:$0xff]
        %v512 = vld [vmem:[#allocation9 + $0x240] sm:$0xff]
        %v513 = vld [vmem:[#allocation9 + $0x248] sm:$0xff]
        %v514 = vld [vmem:[#allocation9 + $0x250] sm:$0xff]
        %v515 = vld [vmem:[#allocation9 + $0x258] sm:$0xff]
        %v516 = vld [vmem:[#allocation9 + $0x260] sm:$0xff]
        %v517 = vld [vmem:[#allocation9 + $0x268] sm:$0xff]
        %v518 = vld [vmem:[#allocation9 + $0x270] sm:$0xff]
        %v519 = vld [vmem:[#allocation9 + $0x278] sm:$0xff]
        %v520 = vld [vmem:[#allocation9 + $0x280] sm:$0xff]
        %v521 = vld [vmem:[#allocation9 + $0x288] sm:$0xff]
        %v522 = vld [vmem:[#allocation9 + $0x290] sm:$0xff]
        %v523 = vld [vmem:[#allocation9 + $0x298] sm:$0xff]
        %v524 = vld [vmem:[#allocation9 + $0x2a0] sm:$0xff]
        %v525 = vld [vmem:[#allocation9 + $0x2a8] sm:$0xff]
        %v526 = vld [vmem:[#allocation9 + $0x2b0] sm:$0xff]
        %v527 = vld [vmem:[#allocation9 + $0x2b8] sm:$0xff]
        %v528 = vld [vmem:[#allocation9 + $0x2c0] sm:$0xff]
        %v529 = vld [vmem:[#allocation9 + $0x2c8] sm:$0xff]
        %v530 = vld [vmem:[#allocation9 + $0x2d0] sm:$0xff]
        %v531 = vld [vmem:[#allocation9 + $0x2d8] sm:$0xff]
        %v532 = vld [vmem:[#allocation9 + $0x2e0] sm:$0xff]
        %v533 = vld [vmem:[#allocation9 + $0x2e8] sm:$0xff]
        %v534 = vld [vmem:[#allocation9 + $0x2f0] sm:$0xff]
        %v535 = vld [vmem:[#allocation9 + $0x2f8] sm:$0xff]
        %v536 = vld [vmem:[#allocation9 + $0x300] sm:$0xff]
        %v537 = vld [vmem:[#allocation9 + $0x308] sm:$0xff]
        %v538 = vld [vmem:[#allocation9 + $0x310] sm:$0xff]
        %v539 = vld [vmem:[#allocation9 + $0x318] sm:$0xff]
        %v540 = vld [vmem:[#allocation9 + $0x320] sm:$0xff]
        %v541 = vld [vmem:[#allocation9 + $0x328] sm:$0xff]
        %v542 = vld [vmem:[#allocation9 + $0x330] sm:$0xff]
        %v543 = vld [vmem:[#allocation9 + $0x338] sm:$0xff]
        %v544 = vld [vmem:[#allocation9 + $0x340] sm:$0xff]
        %v545 = vld [vmem:[#allocation9 + $0x348] sm:$0xff]
        %v546 = vld [vmem:[#allocation9 + $0x350] sm:$0xff]
        %v547 = vld [vmem:[#allocation9 + $0x358] sm:$0xff]
        %v548 = vld [vmem:[#allocation9 + $0x360] sm:$0xff]
        %v549 = vld [vmem:[#allocation9 + $0x368] sm:$0xff]
        %v550 = vld [vmem:[#allocation9 + $0x370] sm:$0xff]
        %v551 = vld [vmem:[#allocation9 + $0x378] sm:$0xff]
        %v552 = vld [vmem:[#allocation9 + $0x380] sm:$0xff]
        %v553 = vld [vmem:[#allocation9 + $0x388] sm:$0xff]
        %v554 = vld [vmem:[#allocation9 + $0x390] sm:$0xff]
        %v555 = vld [vmem:[#allocation9 + $0x398] sm:$0xff]
        %v556 = vld [vmem:[#allocation9 + $0x3a0] sm:$0xff]
        %v557 = vld [vmem:[#allocation9 + $0x3a8] sm:$0xff]
        %v558 = vld [vmem:[#allocation9 + $0x3b0] sm:$0xff]
        %v559 = vld [vmem:[#allocation9 + $0x3b8] sm:$0xff]
        %v560 = vld [vmem:[#allocation9 + $0x3c0] sm:$0xff]
        %v561 = vld [vmem:[#allocation9 + $0x3c8] sm:$0xff]
        %v562 = vld [vmem:[#allocation9 + $0x3d0] sm:$0xff]
        %v563 = vld [vmem:[#allocation9 + $0x3d8] sm:$0xff]
        %v564 = vld [vmem:[#allocation9 + $0x3e0] sm:$0xff]
        %v565 = vld [vmem:[#allocation9 + $0x3e8] sm:$0xff]
        %v566 = vld [vmem:[#allocation9 + $0x3f0] sm:$0xff]
        %v567 = vld [vmem:[#allocation9 + $0x3f8] sm:$0xff]
        %v568 = vld [vmem:[#allocation9 + $0x400] sm:$0xff]
        %v569 = vld [vmem:[#allocation9 + $0x408] sm:$0xff]
        %v570 = vld [vmem:[#allocation9 + $0x410] sm:$0xff]
        %v571 = vld [vmem:[#allocation9 + $0x418] sm:$0xff]
        %v572 = vld [vmem:[#allocation9 + $0x420] sm:$0xff]
        %v573 = vld [vmem:[#allocation9 + $0x428] sm:$0xff]
        %v574 = vld [vmem:[#allocation9 + $0x430] sm:$0xff]
        %v575 = vld [vmem:[#allocation9 + $0x438] sm:$0xff]
        %v576 = vld [vmem:[#allocation9 + $0x440] sm:$0xff]
        %v577 = vld [vmem:[#allocation9 + $0x448] sm:$0xff]
        %v578 = vld [vmem:[#allocation9 + $0x450] sm:$0xff]
        %v579 = vld [vmem:[#allocation9 + $0x458] sm:$0xff]
        %v580 = vld [vmem:[#allocation9 + $0x460] sm:$0xff]
        %v581 = vld [vmem:[#allocation9 + $0x468] sm:$0xff]
        %v582 = vld [vmem:[#allocation9 + $0x470] sm:$0xff]
        %v583 = vld [vmem:[#allocation9 + $0x478] sm:$0xff]
        %v584 = vld [vmem:[#allocation9 + $0x480] sm:$0xff]
        %v585 = vld [vmem:[#allocation9 + $0x488] sm:$0xff]
        %v586 = vld [vmem:[#allocation9 + $0x490] sm:$0xff]
        %v587 = vld [vmem:[#allocation9 + $0x498] sm:$0xff]
        %v588 = vld [vmem:[#allocation9 + $0x4a0] sm:$0xff]
        %v589 = vld [vmem:[#allocation9 + $0x4a8] sm:$0xff]
        %v590 = vld [vmem:[#allocation9 + $0x4b0] sm:$0xff]
        %v591 = vld [vmem:[#allocation9 + $0x4b8] sm:$0xff]
        %v592 = vld [vmem:[#allocation9 + $0x4c0] sm:$0xff]
        %v593 = vld [vmem:[#allocation9 + $0x4c8] sm:$0xff]
        %v594 = vld [vmem:[#allocation9 + $0x4d0] sm:$0xff]
        %v595 = vld [vmem:[#allocation9 + $0x4d8] sm:$0xff]
        %v596 = vld [vmem:[#allocation9 + $0x4e0] sm:$0xff]
        %v597 = vld [vmem:[#allocation9 + $0x4e8] sm:$0xff]
        %v598 = vld [vmem:[#allocation9 + $0x4f0] sm:$0xff]
        %v599 = vld [vmem:[#allocation9 + $0x4f8] sm:$0xff]
        %v600 = vld [vmem:[#allocation9 + $0x500] sm:$0xff]
        %v601 = vld [vmem:[#allocation9 + $0x508] sm:$0xff]
        %v602 = vld [vmem:[#allocation9 + $0x510] sm:$0xff]
        %v603 = vld [vmem:[#allocation9 + $0x518] sm:$0xff]
        %v604 = vld [vmem:[#allocation9 + $0x520] sm:$0xff]
        %v605 = vld [vmem:[#allocation9 + $0x528] sm:$0xff]
        %v606 = vld [vmem:[#allocation9 + $0x530] sm:$0xff]
        %v607 = vld [vmem:[#allocation9 + $0x538] sm:$0xff]
        %v608 = vld [vmem:[#allocation9 + $0x540] sm:$0xff]
        %v609 = vld [vmem:[#allocation9 + $0x548] sm:$0xff]
        %v610 = vld [vmem:[#allocation9 + $0x550] sm:$0xff]
        %v611 = vld [vmem:[#allocation9 + $0x558] sm:$0xff]
        %v612 = vld [vmem:[#allocation9 + $0x560] sm:$0xff]
        %v613 = vld [vmem:[#allocation9 + $0x568] sm:$0xff]
        %v614 = vld [vmem:[#allocation9 + $0x570] sm:$0xff]
        %v615 = vld [vmem:[#allocation9 + $0x578] sm:$0xff]
        %v616 = vld [vmem:[#allocation9 + $0x580] sm:$0xff]
        %v617 = vld [vmem:[#allocation9 + $0x588] sm:$0xff]
        %v618 = vld [vmem:[#allocation9 + $0x590] sm:$0xff]
        %v619 = vld [vmem:[#allocation9 + $0x598] sm:$0xff]
        %v620 = vld [vmem:[#allocation9 + $0x5a0] sm:$0xff]
        %v621 = vld [vmem:[#allocation9 + $0x5a8] sm:$0xff]
        %v622 = vld [vmem:[#allocation9 + $0x5b0] sm:$0xff]
        %v623 = vld [vmem:[#allocation9 + $0x5b8] sm:$0xff]
        %v624 = vld [vmem:[#allocation9 + $0x5c0] sm:$0xff]
        %v625 = vld [vmem:[#allocation9 + $0x5c8] sm:$0xff]
        %v626 = vld [vmem:[#allocation9 + $0x5d0] sm:$0xff]
        %v627 = vld [vmem:[#allocation9 + $0x5d8] sm:$0xff]
        %v628 = vld [vmem:[#allocation9 + $0x5e0] sm:$0xff]
        %v629 = vld [vmem:[#allocation9 + $0x5e8] sm:$0xff]
        %v630 = vld [vmem:[#allocation9 + $0x5f0] sm:$0xff]
        %v631 = vld [vmem:[#allocation9 + $0x5f8] sm:$0xff]
        %v632 = vld [vmem:[#allocation9 + $0x600] sm:$0xff]
        %v633 = vld [vmem:[#allocation9 + $0x608] sm:$0xff]
        %v634 = vld [vmem:[#allocation9 + $0x610] sm:$0xff]
        %v635 = vld [vmem:[#allocation9 + $0x618] sm:$0xff]
        %v636 = vld [vmem:[#allocation9 + $0x620] sm:$0xff]
        %v637 = vld [vmem:[#allocation9 + $0x628] sm:$0xff]
        %v638 = vld [vmem:[#allocation9 + $0x630] sm:$0xff]
        %v639 = vld [vmem:[#allocation9 + $0x638] sm:$0xff]
        %v640 = vld [vmem:[#allocation9 + $0x640] sm:$0xff]
        %v641 = vld [vmem:[#allocation9 + $0x648] sm:$0xff]
        %v642 = vld [vmem:[#allocation9 + $0x650] sm:$0xff]
        %v643 = vld [vmem:[#allocation9 + $0x658] sm:$0xff]
        %v644 = vld [vmem:[#allocation9 + $0x660] sm:$0xff]
        %v645 = vld [vmem:[#allocation9 + $0x668] sm:$0xff]
        %v646 = vld [vmem:[#allocation9 + $0x670] sm:$0xff]
        %v647 = vld [vmem:[#allocation9 + $0x678] sm:$0xff]
        %v648 = vld [vmem:[#allocation9 + $0x680] sm:$0xff]
        %v649 = vld [vmem:[#allocation9 + $0x688] sm:$0xff]
        %v650 = vld [vmem:[#allocation9 + $0x690] sm:$0xff]
        %v651 = vld [vmem:[#allocation9 + $0x698] sm:$0xff]
        %v652 = vld [vmem:[#allocation9 + $0x6a0] sm:$0xff]
        %v653 = vld [vmem:[#allocation9 + $0x6a8] sm:$0xff]
        %v654 = vld [vmem:[#allocation9 + $0x6b0] sm:$0xff]
        %v655 = vld [vmem:[#allocation9 + $0x6b8] sm:$0xff]
        %v656 = vld [vmem:[#allocation9 + $0x6c0] sm:$0xff]
        %v657 = vld [vmem:[#allocation9 + $0x6c8] sm:$0xff]
        %v658 = vld [vmem:[#allocation9 + $0x6d0] sm:$0xff]
        %v659 = vld [vmem:[#allocation9 + $0x6d8] sm:$0xff]
        %v660 = vld [vmem:[#allocation9 + $0x6e0] sm:$0xff]
        %v661 = vld [vmem:[#allocation9 + $0x6e8] sm:$0xff]
        %v662 = vld [vmem:[#allocation9 + $0x6f0] sm:$0xff]
        %v663 = vld [vmem:[#allocation9 + $0x6f8] sm:$0xff]
        %v664 = vld [vmem:[#allocation9 + $0x700] sm:$0xff]
        %v665 = vld [vmem:[#allocation9 + $0x708] sm:$0xff]
        %v666 = vld [vmem:[#allocation9 + $0x710] sm:$0xff]
        %v667 = vld [vmem:[#allocation9 + $0x718] sm:$0xff]
        %v668 = vld [vmem:[#allocation9 + $0x720] sm:$0xff]
        %v669 = vld [vmem:[#allocation9 + $0x728] sm:$0xff]
        %v670 = vld [vmem:[#allocation9 + $0x730] sm:$0xff]
        %v671 = vld [vmem:[#allocation9 + $0x738] sm:$0xff]
        %v672 = vld [vmem:[#allocation9 + $0x740] sm:$0xff]
        %v673 = vld [vmem:[#allocation9 + $0x748] sm:$0xff]
        %v674 = vld [vmem:[#allocation9 + $0x750] sm:$0xff]
        %v675 = vld [vmem:[#allocation9 + $0x758] sm:$0xff]
        %v676 = vld [vmem:[#allocation9 + $0x760] sm:$0xff]
        %v677 = vld [vmem:[#allocation9 + $0x768] sm:$0xff]
        %v678 = vld [vmem:[#allocation9 + $0x770] sm:$0xff]
        %v679 = vld [vmem:[#allocation9 + $0x778] sm:$0xff]
        %v680 = vld [vmem:[#allocation9 + $0x780] sm:$0xff]
        %v681 = vld [vmem:[#allocation9 + $0x788] sm:$0xff]
        %v682 = vld [vmem:[#allocation9 + $0x790] sm:$0xff]
        %v683 = vld [vmem:[#allocation9 + $0x798] sm:$0xff]
        %v684 = vld [vmem:[#allocation9 + $0x7a0] sm:$0xff]
        %v685 = vld [vmem:[#allocation9 + $0x7a8] sm:$0xff]
        %v686 = vld [vmem:[#allocation9 + $0x7b0] sm:$0xff]
        %v687 = vld [vmem:[#allocation9 + $0x7b8] sm:$0xff]
        %v688 = vld [vmem:[#allocation9 + $0x7c0] sm:$0xff]
        %v689 = vld [vmem:[#allocation9 + $0x7c8] sm:$0xff]
        %v690 = vld [vmem:[#allocation9 + $0x7d0] sm:$0xff]
        %v691 = vld [vmem:[#allocation9 + $0x7d8] sm:$0xff]
        %v692 = vld [vmem:[#allocation9 + $0x7e0] sm:$0xff]
        %v693 = vld [vmem:[#allocation9 + $0x7e8] sm:$0xff]
        %v694 = vld [vmem:[#allocation9 + $0x7f0] sm:$0xff]
        %v695 = vld [vmem:[#allocation9 + $0x7f8] sm:$0xff]
        %696 = vmatpush.msra.mxu0 %v560
        %697 = vmatpush.msra.mxu0 %v552
        %698 = vmatpush.msra.mxu0 %v544
        %699 = vmatpush.msra.mxu0 %v536
        %700 = vmatpush.msra.mxu0 %v528
        %701 = vmatpush.msra.mxu0 %v520
        %702 = vmatpush.msra.mxu0 %v512
        %703 = vmatpush.msra.mxu0 %v504
        %704 = vmatpush.msra.mxu0 %v496
        %705 = vmatpush.msra.mxu0 %v488
        %706 = vmatpush.msra.mxu0 %v480
        %707 = vmatpush.msra.mxu0 %v472
        %708 = vmatpush.msra.mxu0 %v464
        %709 = vmatpush.msra.mxu0 %v456
        %710 = vmatpush.msra.mxu0 %v448
        %711 = vmatpush.msra.mxu0 %v440
        %712 = vmatmul.f32.gmra.mxu0 %v438
        %v713 = vpop.f32.mrf.mxu0
        %v714 = vadd.f32 0.0, %v713
        %715 = vdwg.mxu0
        %716 = vmatpush.msra.mxu0 %v688
        %717 = vmatpush.msra.mxu0 %v680
        %718 = vmatpush.msra.mxu0 %v672
        %719 = vmatpush.msra.mxu0 %v664
        %720 = vmatpush.msra.mxu0 %v656
        %721 = vmatpush.msra.mxu0 %v648
        %722 = vmatpush.msra.mxu0 %v640
        %723 = vmatpush.msra.mxu0 %v632
        %724 = vmatpush.msra.mxu0 %v624
        %725 = vmatpush.msra.mxu0 %v616
        %726 = vmatpush.msra.mxu0 %v608
        %727 = vmatpush.msra.mxu0 %v600
        %728 = vmatpush.msra.mxu0 %v592
        %729 = vmatpush.msra.mxu0 %v584
        %730 = vmatpush.msra.mxu0 %v576
        %731 = vmatpush.msra.mxu0 %v568
        %732 = vmatmul.f32.gmra.mxu0 %v439
        %v733 = vpop.f32.mrf.mxu0
        %v734 = vadd.f32 %v714, %v733
        %735 = vdwg.mxu0
        %736 = vmatpush.msra.mxu0 %v561
        %737 = vmatpush.msra.mxu0 %v553
        %738 = vmatpush.msra.mxu0 %v545
        %739 = vmatpush.msra.mxu0 %v537
        %740 = vmatpush.msra.mxu0 %v529
        %741 = vmatpush.msra.mxu0 %v521
        %742 = vmatpush.msra.mxu0 %v513
        %743 = vmatpush.msra.mxu0 %v505
        %744 = vmatpush.msra.mxu0 %v497
        %745 = vmatpush.msra.mxu0 %v489
        %746 = vmatpush.msra.mxu0 %v481
        %747 = vmatpush.msra.mxu0 %v473
        %748 = vmatpush.msra.mxu0 %v465
        %749 = vmatpush.msra.mxu0 %v457
        %750 = vmatpush.msra.mxu0 %v449
        %751 = vmatpush.msra.mxu0 %v441
        %752 = vmatmul.f32.gmra.mxu0 %v438
        %v753 = vpop.f32.mrf.mxu0
        %v754 = vadd.f32 0.0, %v753
        %755 = vdwg.mxu0
        %756 = vmatpush.msra.mxu0 %v689
        %757 = vmatpush.msra.mxu0 %v681
        %758 = vmatpush.msra.mxu0 %v673
        %759 = vmatpush.msra.mxu0 %v665
        %760 = vmatpush.msra.mxu0 %v657
        %761 = vmatpush.msra.mxu0 %v649
        %762 = vmatpush.msra.mxu0 %v641
        %763 = vmatpush.msra.mxu0 %v633
        %764 = vmatpush.msra.mxu0 %v625
        %765 = vmatpush.msra.mxu0 %v617
        %766 = vmatpush.msra.mxu0 %v609
        %767 = vmatpush.msra.mxu0 %v601
        %768 = vmatpush.msra.mxu0 %v593
        %769 = vmatpush.msra.mxu0 %v585
        %770 = vmatpush.msra.mxu0 %v577
        %771 = vmatpush.msra.mxu0 %v569
        %772 = vmatmul.f32.gmra.mxu0 %v439
        %v773 = vpop.f32.mrf.mxu0
        %v774 = vadd.f32 %v754, %v773
        %775 = vdwg.mxu0
        %776 = vmatpush.msra.mxu0 %v562
        %777 = vmatpush.msra.mxu0 %v554
        %778 = vmatpush.msra.mxu0 %v546
        %779 = vmatpush.msra.mxu0 %v538
        %780 = vmatpush.msra.mxu0 %v530
        %781 = vmatpush.msra.mxu0 %v522
        %782 = vmatpush.msra.mxu0 %v514
        %783 = vmatpush.msra.mxu0 %v506
        %784 = vmatpush.msra.mxu0 %v498
        %785 = vmatpush.msra.mxu0 %v490
        %786 = vmatpush.msra.mxu0 %v482
        %787 = vmatpush.msra.mxu0 %v474
        %788 = vmatpush.msra.mxu0 %v466
        %789 = vmatpush.msra.mxu0 %v458
        %790 = vmatpush.msra.mxu0 %v450
        %791 = vmatpush.msra.mxu0 %v442
        %792 = vmatmul.f32.gmra.mxu0 %v438
        %v793 = vpop.f32.mrf.mxu0
        %v794 = vadd.f32 0.0, %v793
        %795 = vdwg.mxu0
        %796 = vmatpush.msra.mxu0 %v690
        %797 = vmatpush.msra.mxu0 %v682
        %798 = vmatpush.msra.mxu0 %v674
        %799 = vmatpush.msra.mxu0 %v666
        %800 = vmatpush.msra.mxu0 %v658
        %801 = vmatpush.msra.mxu0 %v650
        %802 = vmatpush.msra.mxu0 %v642
        %803 = vmatpush.msra.mxu0 %v634
        %804 = vmatpush.msra.mxu0 %v626
        %805 = vmatpush.msra.mxu0 %v618
        %806 = vmatpush.msra.mxu0 %v610
        %807 = vmatpush.msra.mxu0 %v602
        %808 = vmatpush.msra.mxu0 %v594
        %809 = vmatpush.msra.mxu0 %v586
        %810 = vmatpush.msra.mxu0 %v578
        %811 = vmatpush.msra.mxu0 %v570
        %812 = vmatmul.f32.gmra.mxu0 %v439
        %v813 = vpop.f32.mrf.mxu0
        %v814 = vadd.f32 %v794, %v813
        %815 = vdwg.mxu0
        %816 = vmatpush.msra.mxu0 %v563
        %817 = vmatpush.msra.mxu0 %v555
        %818 = vmatpush.msra.mxu0 %v547
        %819 = vmatpush.msra.mxu0 %v539
        %820 = vmatpush.msra.mxu0 %v531
        %821 = vmatpush.msra.mxu0 %v523
        %822 = vmatpush.msra.mxu0 %v515
        %823 = vmatpush.msra.mxu0 %v507
        %824 = vmatpush.msra.mxu0 %v499
        %825 = vmatpush.msra.mxu0 %v491
        %826 = vmatpush.msra.mxu0 %v483
        %827 = vmatpush.msra.mxu0 %v475
        %828 = vmatpush.msra.mxu0 %v467
        %829 = vmatpush.msra.mxu0 %v459
        %830 = vmatpush.msra.mxu0 %v451
        %831 = vmatpush.msra.mxu0 %v443
        %832 = vmatmul.f32.gmra.mxu0 %v438
        %v833 = vpop.f32.mrf.mxu0
        %v834 = vadd.f32 0.0, %v833
        %835 = vdwg.mxu0
        %836 = vmatpush.msra.mxu0 %v691
        %837 = vmatpush.msra.mxu0 %v683
        %838 = vmatpush.msra.mxu0 %v675
        %839 = vmatpush.msra.mxu0 %v667
        %840 = vmatpush.msra.mxu0 %v659
        %841 = vmatpush.msra.mxu0 %v651
        %842 = vmatpush.msra.mxu0 %v643
        %843 = vmatpush.msra.mxu0 %v635
        %844 = vmatpush.msra.mxu0 %v627
        %845 = vmatpush.msra.mxu0 %v619
        %846 = vmatpush.msra.mxu0 %v611
        %847 = vmatpush.msra.mxu0 %v603
        %848 = vmatpush.msra.mxu0 %v595
        %849 = vmatpush.msra.mxu0 %v587
        %850 = vmatpush.msra.mxu0 %v579
        %851 = vmatpush.msra.mxu0 %v571
        %852 = vmatmul.f32.gmra.mxu0 %v439
        %v853 = vpop.f32.mrf.mxu0
        %v854 = vadd.f32 %v834, %v853
        %855 = vdwg.mxu0
        %856 = vmatpush.msra.mxu0 %v564
        %857 = vmatpush.msra.mxu0 %v556
        %858 = vmatpush.msra.mxu0 %v548
        %859 = vmatpush.msra.mxu0 %v540
        %860 = vmatpush.msra.mxu0 %v532
        %861 = vmatpush.msra.mxu0 %v524
        %862 = vmatpush.msra.mxu0 %v516
        %863 = vmatpush.msra.mxu0 %v508
        %864 = vmatpush.msra.mxu0 %v500
        %865 = vmatpush.msra.mxu0 %v492
        %866 = vmatpush.msra.mxu0 %v484
        %867 = vmatpush.msra.mxu0 %v476
        %868 = vmatpush.msra.mxu0 %v468
        %869 = vmatpush.msra.mxu0 %v460
        %870 = vmatpush.msra.mxu0 %v452
        %871 = vmatpush.msra.mxu0 %v444
        %872 = vmatmul.f32.gmra.mxu0 %v438
        %v873 = vpop.f32.mrf.mxu0
        %v874 = vadd.f32 0.0, %v873
        %875 = vdwg.mxu0
        %876 = vmatpush.msra.mxu0 %v692
        %877 = vmatpush.msra.mxu0 %v684
        %878 = vmatpush.msra.mxu0 %v676
        %879 = vmatpush.msra.mxu0 %v668
        %880 = vmatpush.msra.mxu0 %v660
        %881 = vmatpush.msra.mxu0 %v652
        %882 = vmatpush.msra.mxu0 %v644
        %883 = vmatpush.msra.mxu0 %v636
        %884 = vmatpush.msra.mxu0 %v628
        %885 = vmatpush.msra.mxu0 %v620
        %886 = vmatpush.msra.mxu0 %v612
        %887 = vmatpush.msra.mxu0 %v604
        %888 = vmatpush.msra.mxu0 %v596
        %889 = vmatpush.msra.mxu0 %v588
        %890 = vmatpush.msra.mxu0 %v580
        %891 = vmatpush.msra.mxu0 %v572
        %892 = vmatmul.f32.gmra.mxu0 %v439
        %v893 = vpop.f32.mrf.mxu0
        %v894 = vadd.f32 %v874, %v893
        %895 = vdwg.mxu0
        %896 = vmatpush.msra.mxu0 %v565
        %897 = vmatpush.msra.mxu0 %v557
        %898 = vmatpush.msra.mxu0 %v549
        %899 = vmatpush.msra.mxu0 %v541
        %900 = vmatpush.msra.mxu0 %v533
        %901 = vmatpush.msra.mxu0 %v525
        %902 = vmatpush.msra.mxu0 %v517
        %903 = vmatpush.msra.mxu0 %v509
        %904 = vmatpush.msra.mxu0 %v501
        %905 = vmatpush.msra.mxu0 %v493
        %906 = vmatpush.msra.mxu0 %v485
        %907 = vmatpush.msra.mxu0 %v477
        %908 = vmatpush.msra.mxu0 %v469
        %909 = vmatpush.msra.mxu0 %v461
        %910 = vmatpush.msra.mxu0 %v453
        %911 = vmatpush.msra.mxu0 %v445
        %912 = vmatmul.f32.gmra.mxu0 %v438
        %v913 = vpop.f32.mrf.mxu0
        %v914 = vadd.f32 0.0, %v913
        %915 = vdwg.mxu0
        %916 = vmatpush.msra.mxu0 %v693
        %917 = vmatpush.msra.mxu0 %v685
        %918 = vmatpush.msra.mxu0 %v677
        %919 = vmatpush.msra.mxu0 %v669
        %920 = vmatpush.msra.mxu0 %v661
        %921 = vmatpush.msra.mxu0 %v653
        %922 = vmatpush.msra.mxu0 %v645
        %923 = vmatpush.msra.mxu0 %v637
        %924 = vmatpush.msra.mxu0 %v629
        %925 = vmatpush.msra.mxu0 %v621
        %926 = vmatpush.msra.mxu0 %v613
        %927 = vmatpush.msra.mxu0 %v605
        %928 = vmatpush.msra.mxu0 %v597
        %929 = vmatpush.msra.mxu0 %v589
        %930 = vmatpush.msra.mxu0 %v581
        %931 = vmatpush.msra.mxu0 %v573
        %932 = vmatmul.f32.gmra.mxu0 %v439
        %v933 = vpop.f32.mrf.mxu0
        %v934 = vadd.f32 %v914, %v933
        %935 = vdwg.mxu0
        %936 = vmatpush.msra.mxu0 %v566
        %937 = vmatpush.msra.mxu0 %v558
        %938 = vmatpush.msra.mxu0 %v550
        %939 = vmatpush.msra.mxu0 %v542
        %940 = vmatpush.msra.mxu0 %v534
        %941 = vmatpush.msra.mxu0 %v526
        %942 = vmatpush.msra.mxu0 %v518
        %943 = vmatpush.msra.mxu0 %v510
        %944 = vmatpush.msra.mxu0 %v502
        %945 = vmatpush.msra.mxu0 %v494
        %946 = vmatpush.msra.mxu0 %v486
        %947 = vmatpush.msra.mxu0 %v478
        %948 = vmatpush.msra.mxu0 %v470
        %949 = vmatpush.msra.mxu0 %v462
        %950 = vmatpush.msra.mxu0 %v454
        %951 = vmatpush.msra.mxu0 %v446
        %952 = vmatmul.f32.gmra.mxu0 %v438
        %v953 = vpop.f32.mrf.mxu0
        %v954 = vadd.f32 0.0, %v953
        %955 = vdwg.mxu0
        %956 = vmatpush.msra.mxu0 %v694
        %957 = vmatpush.msra.mxu0 %v686
        %958 = vmatpush.msra.mxu0 %v678
        %959 = vmatpush.msra.mxu0 %v670
        %960 = vmatpush.msra.mxu0 %v662
        %961 = vmatpush.msra.mxu0 %v654
        %962 = vmatpush.msra.mxu0 %v646
        %963 = vmatpush.msra.mxu0 %v638
        %964 = vmatpush.msra.mxu0 %v630
        %965 = vmatpush.msra.mxu0 %v622
        %966 = vmatpush.msra.mxu0 %v614
        %967 = vmatpush.msra.mxu0 %v606
        %968 = vmatpush.msra.mxu0 %v598
        %969 = vmatpush.msra.mxu0 %v590
        %970 = vmatpush.msra.mxu0 %v582
        %971 = vmatpush.msra.mxu0 %v574
        %972 = vmatmul.f32.gmra.mxu0 %v439
        %v973 = vpop.f32.mrf.mxu0
        %v974 = vadd.f32 %v954, %v973
        %975 = vdwg.mxu0
        %976 = vmatpush.msra.mxu0 %v567
        %977 = vmatpush.msra.mxu0 %v559
        %978 = vmatpush.msra.mxu0 %v551
        %979 = vmatpush.msra.mxu0 %v543
        %980 = vmatpush.msra.mxu0 %v535
        %981 = vmatpush.msra.mxu0 %v527
        %982 = vmatpush.msra.mxu0 %v519
        %983 = vmatpush.msra.mxu0 %v511
        %984 = vmatpush.msra.mxu0 %v503
        %985 = vmatpush.msra.mxu0 %v495
        %986 = vmatpush.msra.mxu0 %v487
        %987 = vmatpush.msra.mxu0 %v479
        %988 = vmatpush.msra.mxu0 %v471
        %989 = vmatpush.msra.mxu0 %v463
        %990 = vmatpush.msra.mxu0 %v455
        %991 = vmatpush.msra.mxu0 %v447
        %992 = vmatmul.f32.gmra.mxu0 %v438
        %v993 = vpop.f32.mrf.mxu0
        %v994 = vadd.f32 0.0, %v993
        %995 = vdwg.mxu0
        %996 = vmatpush.msra.mxu0 %v695
        %997 = vmatpush.msra.mxu0 %v687
        %998 = vmatpush.msra.mxu0 %v679
        %999 = vmatpush.msra.mxu0 %v671
        %1000 = vmatpush.msra.mxu0 %v663
        %1001 = vmatpush.msra.mxu0 %v655
        %1002 = vmatpush.msra.mxu0 %v647
        %1003 = vmatpush.msra.mxu0 %v639
        %1004 = vmatpush.msra.mxu0 %v631
        %1005 = vmatpush.msra.mxu0 %v623
        %1006 = vmatpush.msra.mxu0 %v615
        %1007 = vmatpush.msra.mxu0 %v607
        %1008 = vmatpush.msra.mxu0 %v599
        %1009 = vmatpush.msra.mxu0 %v591
        %1010 = vmatpush.msra.mxu0 %v583
        %1011 = vmatpush.msra.mxu0 %v575
        %1012 = vmatmul.f32.gmra.mxu0 %v439
        %v1013 = vpop.f32.mrf.mxu0
        %v1014 = vadd.f32 %v994, %v1013
        %1015 = vdwg.mxu0
        %1016 = vst [vmem:[%s263] sm:$0xff] %v734
        %1017 = vst [vmem:[%s263 + $0x8] sm:$0xff] %v774
        %1018 = vst [vmem:[%s263 + $0x10] sm:$0xff] %v814
        %1019 = vst [vmem:[%s263 + $0x18] sm:$0xff] %v854
        %1020 = vst [vmem:[%s263 + $0x20] sm:$0xff] %v894
        %1021 = vst [vmem:[%s263 + $0x28] sm:$0xff] %v934
        %1022 = vst [vmem:[%s263 + $0x30] sm:$0xff] %v974
        %1023 = vst [vmem:[%s263 + $0x38] sm:$0xff] %v1014
        %s1024 = sand.u32 %s120, 1
        %s1025 = scalar_lea.sflag [#allocation5], %s1024
        %s1026 = sand.u32 %s120, 1
        %s1027 = smul.addr %s1026, 64
        %s1028 = scalar_lea.vmem [#allocation11], %s1027
        // Predicated region
        $region53: #{tpu_custom_call.1} parent=35 // pred_check
          %p1029 = pneg %p130
        $region54: #{tpu_custom_call.1} parent=35 // pred_check_branch
          %1031 = sbr.rel (%p1029) target = $region56
        $region55: #{tpu_custom_call.1} parent=35 // pred_region
          %1033 = vsyncadd %s1025, 0
          %s1034 = smul.addr %s23, 8
          %s1035 = smul.addr %s1034, 8
          %s1036 = scalar_lea.hbm %s4, %s1035
          %s1038 = sshll.u32 %s1028, 4
          %s1039 = int_to_ptr.vmem [resolvable:$true] %s1038
          %s1040 = sshll.u32 %s1036, 4
          %s1041 = int_to_ptr.hbm [resolvable:$true] %s1040
          %1043 = dma.vmem_to_hbm [thread:$0]  %s1039, 1024, %s1041, %s1025
        $region56: #{tpu_custom_call.1} parent=35 // pred_fallthru
          _
      $region36: #{tpu_custom_call.1} parent=5 // pred_fallthru
        _
      %p1044 = scmp.le.s32.totalorder 2, %s18
      // Predicated region
      $region57: #{tpu_custom_call.1} parent=5 // pred_check
        %p1045 = pneg %p1044
      $region58: #{tpu_custom_call.1} parent=5 // pred_check_branch
        %1047 = sbr.rel (%p1045) target = $region60
      $region59: #{tpu_custom_call.1} parent=5 // pred_region
        %s1048 = ssub.s32 %s18, 2
        // Predicated region
        $region61: #{tpu_custom_call.1} parent=59 // pred_check
          %p1049 = pneg %p136
        $region62: #{tpu_custom_call.1} parent=59 // pred_check_branch
          %1051 = sbr.rel (%p1049) target = $region64
        $region63: #{tpu_custom_call.1} parent=59 // pred_region
          %s1052 = sand.u32 %s121, 1
          %s1053 = scalar_lea.sflag [#allocation5], %s1052
          %s1054 = sand.u32 %s121, 1
          %s1055 = smul.addr %s1054, 64
          %s1056 = scalar_lea.vmem [#allocation11], %s1055
          %1058 = dma.done %s1053, 1024
        $region64: #{tpu_custom_call.1} parent=59 // pred_fallthru
          _
      $region60: #{tpu_custom_call.1} parent=5 // pred_fallthru
        _
    $region6: #{tpu_custom_call.1} parent=1 // loop_footer
      %s22 = sadd.s32 1, %s18
    $region7: #{tpu_custom_call.1} parent=1 // loop_footer_branch
      %17 = sbr.rel target = $region3
    $region8: #{tpu_custom_call.1} parent=1 // loop_exit
      _
    %1059 = vsyncpa [#allocation4], 1
    %s1060 = scalar_lea.sflag [#allocation4], 1
    %1061 = vsyncpa %s1060, 1
    %1062 = vsyncpa [#allocation7], 1
    %1063 = vsyncpa [#allocation10], 1
    %1064 = vsyncpa [#allocation5], 1
    %s1065 = scalar_lea.sflag [#allocation5], 1
    %1066 = vsyncpa %s1065, 1

</llo_original>
